<compile_context>
chip_gen: v7x
topology: tpu7x:2x2x1
jax: 0.10.0
libtpu: 0.0.40
codegen_flags: <defaults>
</compile_context>

<pallas_src>
import functools
import math

import jax
import jax.numpy as jnp
from jax.experimental import pallas as pl
from jax.experimental.pallas import tpu as pltpu


def _round_up(x, m):
    return ((x + m - 1) // m) * m


def _pick_tiling(n):
    """Pick (n_pad, tm, tk): large tiles for HBM/DMA efficiency, clamped for
    small graphs so the tiles always divide the padded node count."""
    if n >= 2048:
        tm, tk = 512, 1024
    elif n >= 512:
        tm, tk = 512, 512
    else:
        tm, tk = 256, 256
    n_pad = _round_up(n, math.lcm(tm, tk))
    return n_pad, tm, tk


def _vmem_capacity_bytes():
    try:
        return int(pltpu.get_tpu_info().vmem_capacity_bytes)
    except Exception:
        return 64 * 1024 * 1024   # conservative fallback (v7x per-TC VMEM)


def lightgcn_layer_kernel(a_ref, e_ref, sum_in_ref, emb_out_ref, sum_out_ref,
                          acc_ref, *, tk, resident):
    """One fused LightGCN layer tile:

        emb_out = A @ emb            (bf16 operands, f32 MXU accumulate)
        sum_out = sum_in + emb_out   (running layer-sum, f32, in place)

    a_ref:       (tm, tk)      bf16 tile of the normalized adjacency
    e_ref:       (n_pad, Dp)   bf16 resident embeddings  (resident=True)
                 (tk, Dp)      bf16 streamed emb tile    (resident=False)
    sum_in_ref:  (tm, Dp)      f32 running layer-sum (aliased with sum_out)
    emb_out_ref: (tm, Dp)      bf16 propagated embeddings for this row tile
    sum_out_ref: (tm, Dp)      f32 updated running layer-sum
    acc_ref:     (tm, Dp)      f32 VMEM accumulator, resident across k
    """
    k = pl.program_id(1)

    @pl.when(k == 0)
    def _():
        acc_ref[...] = jnp.zeros_like(acc_ref)

    if resident:
        start = pl.multiple_of(k * tk, tk)
        e_blk = e_ref[pl.ds(start, tk), :]
    else:
        e_blk = e_ref[...]

    acc_ref[...] += jnp.dot(a_ref[...], e_blk,
                            preferred_element_type=jnp.float32)

    @pl.when(k == pl.num_programs(1) - 1)
    def _():
        emb_out_ref[...] = acc_ref[...].astype(emb_out_ref.dtype)
        sum_out_ref[...] = sum_in_ref[...] + acc_ref[...]


def make_lightgcn_layer(n_pad, d_pad, tm, tk):
    """Build the pallas_call for one fused LightGCN layer at fixed shapes."""
    grid = (n_pad // tm, n_pad // tk)
    cap = _vmem_capacity_bytes()

    # VMEM budget (Pallas default double-buffering on tiled operands).
    a_blk = 2 * tm * tk * 2                    # bf16 A tiles
    sum_in_blk = 2 * tm * d_pad * 4            # f32 running-sum in
    emb_out_blk = 2 * tm * d_pad * 2           # bf16 emb out
    sum_out_blk = 2 * tm * d_pad * 4           # f32 running-sum out
    acc_blk = tm * d_pad * 4                   # f32 accumulator scratch
    fixed = a_blk + sum_in_blk + emb_out_blk + sum_out_blk + acc_blk

    emb_resident_bytes = 2 * n_pad * d_pad * 2   # whole emb, bf16 (2 buffers)
    emb_streamed_bytes = 2 * tk * d_pad * 2      # per-k bf16 emb tile

    # Keep emb VMEM-resident for the whole layer when it comfortably fits;
    # otherwise fall back to streaming bf16 tiles along k.
    resident = fixed + emb_resident_bytes + (8 << 20) <= int(0.7 * cap)
    emb_blk = emb_resident_bytes if resident else emb_streamed_bytes
    vmem_limit = min(fixed + emb_blk + (8 << 20), int(0.9 * cap))

    if resident:
        e_spec = pl.BlockSpec((n_pad, d_pad), lambda i, k: (0, 0))
        emb_read_bytes = n_pad * d_pad * 2
    else:
        e_spec = pl.BlockSpec((tk, d_pad), lambda i, k: (k, 0))
        emb_read_bytes = (n_pad // tm) * n_pad * d_pad * 2  # re-streamed / row tile

    cost = pl.CostEstimate(
        flops=2 * n_pad * n_pad * d_pad,
        transcendentals=0,
        bytes_accessed=(n_pad * n_pad * 2            # A stream (bf16)
                        + emb_read_bytes             # emb reads
                        + n_pad * d_pad * (4 + 2 + 4)),  # sum in / emb out / sum out
    )

    kernel = functools.partial(lightgcn_layer_kernel, tk=tk, resident=resident)

    return pl.pallas_call(
        kernel,
        out_shape=(jax.ShapeDtypeStruct((n_pad, d_pad), jnp.bfloat16),
                   jax.ShapeDtypeStruct((n_pad, d_pad), jnp.float32)),
        grid_spec=pltpu.PrefetchScalarGridSpec(
            num_scalar_prefetch=0,
            grid=grid,
            in_specs=[
                pl.BlockSpec((tm, tk), lambda i, k: (i, k)),     # A tile
                e_spec,                                          # embeddings
                pl.BlockSpec((tm, d_pad), lambda i, k: (i, 0)),  # running sum in
            ],
            out_specs=[
                pl.BlockSpec((tm, d_pad), lambda i, k: (i, 0)),  # new embeddings
                pl.BlockSpec((tm, d_pad), lambda i, k: (i, 0)),  # running sum out
            ],
            scratch_shapes=[pltpu.VMEM((tm, d_pad), jnp.float32)],
        ),
        compiler_params=pltpu.CompilerParams(
            dimension_semantics=("parallel", "arbitrary"),
            vmem_limit_bytes=int(vmem_limit),
        ),
        cost_estimate=cost,
        input_output_aliases={2: 1},   # running layer-sum accumulates in place
    )


@functools.partial(jax.jit, static_argnums=(2,))
def recsys_gnn_forward(embedding_weight, edge_index, num_layers):
    """Equivalent of RecSysGNN.forward(edge_index) -> (emb0, out)."""
    n, d = embedding_weight.shape
    from_, to_ = edge_index[0], edge_index[1]

    # Symmetric normalization (matches LightGCNConv.forward).
    deg = jnp.zeros((n,), jnp.float32).at[to_].add(1.0)
    deg_inv_sqrt = jnp.where(deg > 0, deg ** -0.5, 0.0)
    norm = deg_inv_sqrt[from_] * deg_inv_sqrt[to_]

    n_pad, tm, tk = _pick_tiling(n)
    d_pad = _round_up(d, 128)

    # Normalized adjacency, built directly as a padded bf16 array (no f32 N^2
    # intermediate).  Zero padding is exact: padded rows/cols stay zero.
    # TODO(synk): for production (sparse) graph sizes replace this dense O(N^2)
    # adjacency with a CSR scalar-prefetch gather kernel, and narrow A further
    # per generation (int8 on v5e/v6e, fp8 on v7x) with a folded dequant scale.
    a_p = jnp.zeros((n_pad, n_pad), jnp.bfloat16).at[to_, from_].add(
        norm.astype(jnp.bfloat16))

    # Inter-layer embeddings travel in bf16 (MXU operand dtype; halves the emb
    # HBM stream); the running layer-sum stays f32 for the final mean.
    emb = jnp.zeros((n_pad, d_pad), jnp.bfloat16).at[:n, :d].set(
        embedding_weight.astype(jnp.bfloat16))
    layer_sum = jnp.zeros((n_pad, d_pad), jnp.float32).at[:n, :d].set(
        embedding_weight.astype(jnp.float32))

    propagate = make_lightgcn_layer(n_pad, d_pad, tm, tk)

    for _ in range(num_layers):                  # small & static -> unrolled
        emb, layer_sum = propagate(a_p, emb, layer_sum)

    out = (layer_sum * (1.0 / float(num_layers + 1)))[:n, :d]
    return embedding_weight, out.astype(embedding_weight.dtype)


def ref_forward(embedding_weight, edge_index, num_layers):
    """Pure-JAX f32 reference mirroring PyG message-passing semantics."""
    from_, to_ = edge_index[0], edge_index[1]
    n = embedding_weight.shape[0]
    deg = jnp.zeros((n,), embedding_weight.dtype).at[to_].add(1.0)
    dis = jnp.where(deg > 0, deg ** -0.5, 0.0)
    norm = dis[from_] * dis[to_]

    embs = [embedding_weight]
    emb = embedding_weight
    for _ in range(num_layers):
        msgs = norm[:, None] * emb[from_]
        emb = jnp.zeros_like(embedding_weight).at[to_].add(msgs)
        embs.append(emb)
    out = jnp.mean(jnp.stack(embs, axis=0), axis=0)
    return embedding_weight, out


if __name__ == "__main__":
    # Small synthetic problem consistent with the module's __init__.
    num_users = 8
    num_items = 8
    latent_dim = 32
    num_layers = 3
    n_nodes = num_users + num_items
    n_interactions = 24

    key = jax.random.PRNGKey(0)
    k_emb, k_u, k_i = jax.random.split(key, 3)

    # nn.init.normal_(self.embedding.weight, std=0.1)
    embedding_weight = 0.1 * jax.random.normal(
        k_emb, (n_nodes, latent_dim), dtype=jnp.float32
    )

    # Deterministic bipartite user<->item edges, both directions (undirected).
    users = jax.random.randint(k_u, (n_interactions,), 0, num_users)
    items = jax.random.randint(k_i, (n_interactions,), num_users, n_nodes)
    from_ = jnp.concatenate([users, items])
    to_ = jnp.concatenate([items, users])
    edge_index = jnp.stack([from_, to_], axis=0).astype(jnp.int32)  # (2, E)

    emb0, out = recsys_gnn_forward(embedding_weight, edge_index, num_layers)
    jax.block_until_ready(out)

    # Correctness check against the pure-f32 scatter-based reference.
    # (A and inter-layer embeddings are bf16 in the kernel -> loosened tol.)
    ref_emb0, ref_out = ref_forward(embedding_weight, edge_index, num_layers)
    assert jnp.allclose(emb0, ref_emb0)
    assert jnp.allclose(out, ref_out, atol=1e-2, rtol=1e-2)

    print("KERNEL_OK")
</pallas_src>

<mosaic_0001>
module attributes {stable_mosaic.version = 11 : i64} {
  func.func private @main(%arg0: i32) attributes {dimension_semantics = [#tpu.dimension_semantics<core_parallel>], iteration_bounds = array<i64: 2>, tpu.core_type = #tpu.core_type<sc_scalar_subcore>, window_params = []} {
    return
  }
}

module attributes {stable_mosaic.version = 11 : i64} {
  func.func private @main(%arg0: i32) attributes {dimension_semantics = [#tpu.dimension_semantics<core_parallel>], iteration_bounds = array<i64: 2>, tpu.core_type = #tpu.core_type<sc_scalar_subcore>, window_params = []} {
    return
  }
}

module attributes {stable_mosaic.version = 11 : i64} {
  func.func @lightgcn_layer_kernel(%arg0: i32, %arg1: i32, %arg2: memref<256x256xbf16, #tpu.memory_space<vmem>>, %arg3: memref<256x128xbf16, #tpu.memory_space<vmem>>, %arg4: memref<256x128xf32, #tpu.memory_space<vmem>>, %arg5: memref<256x128xbf16, #tpu.memory_space<vmem>>, %arg6: memref<256x128xf32, #tpu.memory_space<vmem>>, %arg7: memref<256x128xf32, #tpu.memory_space<vmem>>) attributes {dimension_semantics = [#tpu.dimension_semantics<parallel>, #tpu.dimension_semantics<arbitrary>], iteration_bounds = array<i64: 1, 1>, scalar_prefetch = 0 : i64, scratch_operands = 1 : i64, tpu.core_type = #tpu.core_type<tc>, window_params = [{transform_indices = @transform_0, window_bounds = array<i64: 256, 256>}, {pipeline_mode = #tpu.pipeline_mode<synchronous>, transform_indices = @transform_1, window_bounds = array<i64: 256, 128>}, {transform_indices = @transform_2, window_bounds = array<i64: 256, 128>}, {transform_indices = @transform_3, window_bounds = array<i64: 256, 128>}, {transform_indices = @transform_4, window_bounds = array<i64: 256, 128>}]} {
    %c0_i32 = arith.constant 0 : i32
    %0 = arith.cmpi eq, %arg1, %c0_i32 : i32
    %1 = arith.extui %0 : i1 to i32
    %c0_i32_0 = arith.constant 0 : i32
    %2 = arith.cmpi ne, %1, %c0_i32_0 : i32
    scf.if %2 {
      %cst_9 = arith.constant 0.000000e+00 : f32
      %15 = vector.broadcast %cst_9 : f32 to vector<256x128xf32>
      %c0_10 = arith.constant 0 : index
      %c0_11 = arith.constant 0 : index
      %16 = vector.load %arg7[%c0_10, %c0_11] : memref<256x128xf32, #tpu.memory_space<vmem>>, vector<256x128xf32>
      tpu.vector_store %arg7[%c0_10, %c0_11], %15 {strides = array<i32>} : memref<256x128xf32, #tpu.memory_space<vmem>>, vector<256x128xf32>,
    } else {
    }
    %c256_i32 = arith.constant 256 : i32
    %3 = arith.muli %arg1, %c256_i32 : i32
    %4 = tpu.assume_multiple %3, 256 : i32
    %5 = arith.index_cast %4 : i32 to index
    %c0 = arith.constant 0 : index
    %6 = vector.load %arg3[%5, %c0] : memref<256x128xbf16, #tpu.memory_space<vmem>>, vector<256x128xbf16>
    %c0_1 = arith.constant 0 : index
    %c0_2 = arith.constant 0 : index
    %7 = vector.load %arg7[%c0_1, %c0_2] : memref<256x128xf32, #tpu.memory_space<vmem>>, vector<256x128xf32>
    %c0_3 = arith.constant 0 : index
    %c0_4 = arith.constant 0 : index
    %8 = vector.load %arg2[%c0_3, %c0_4] : memref<256x256xbf16, #tpu.memory_space<vmem>>, vector<256x256xbf16>
    %cst = arith.constant dense<0.000000e+00> : vector<256x128xf32>
    %9 = tpu.matmul %8, %6, %cst {dimension_numbers = #tpu.dot_dimension_numbers<[1], [0], [0], [1], [0, 0, 1, 1], [], []>} : vector<256x256xbf16>, vector<256x128xbf16>, vector<256x128xf32> -> vector<256x128xf32>
    %10 = arith.addf %7, %9 : vector<256x128xf32>
    %c0_5 = arith.constant 0 : index
    %c0_6 = arith.constant 0 : index
    %11 = vector.load %arg7[%c0_5, %c0_6] : memref<256x128xf32, #tpu.memory_space<vmem>>, vector<256x128xf32>
    tpu.vector_store %arg7[%c0_5, %c0_6], %10 {strides = array<i32>} : memref<256x128xf32, #tpu.memory_space<vmem>>, vector<256x128xf32>,
    %c0_i32_7 = arith.constant 0 : i32
    %12 = arith.cmpi eq, %arg1, %c0_i32_7 : i32
    %13 = arith.extui %12 : i1 to i32
    %c0_i32_8 = arith.constant 0 : i32
    %14 = arith.cmpi ne, %13, %c0_i32_8 : i32
    scf.if %14 {
      %c0_9 = arith.constant 0 : index
      %c0_10 = arith.constant 0 : index
      %15 = vector.load %arg7[%c0_9, %c0_10] : memref<256x128xf32, #tpu.memory_space<vmem>>, vector<256x128xf32>
      %16 = arith.truncf %15 : vector<256x128xf32> to vector<256x128xbf16>
      %c0_11 = arith.constant 0 : index
      %c0_12 = arith.constant 0 : index
      %17 = vector.load %arg5[%c0_11, %c0_12] : memref<256x128xbf16, #tpu.memory_space<vmem>>, vector<256x128xbf16>
      tpu.vector_store %arg5[%c0_11, %c0_12], %16 {strides = array<i32>} : memref<256x128xbf16, #tpu.memory_space<vmem>>, vector<256x128xbf16>,
      %c0_13 = arith.constant 0 : index
      %c0_14 = arith.constant 0 : index
      %18 = vector.load %arg4[%c0_13, %c0_14] : memref<256x128xf32, #tpu.memory_space<vmem>>, vector<256x128xf32>
      %c0_15 = arith.constant 0 : index
      %c0_16 = arith.constant 0 : index
      %19 = vector.load %arg7[%c0_15, %c0_16] : memref<256x128xf32, #tpu.memory_space<vmem>>, vector<256x128xf32>
      %20 = arith.addf %18, %19 : vector<256x128xf32>
      %c0_17 = arith.constant 0 : index
      %c0_18 = arith.constant 0 : index
      %21 = vector.load %arg6[%c0_17, %c0_18] : memref<256x128xf32, #tpu.memory_space<vmem>>, vector<256x128xf32>
      tpu.vector_store %arg6[%c0_17, %c0_18], %20 {strides = array<i32>} : memref<256x128xf32, #tpu.memory_space<vmem>>, vector<256x128xf32>,
    } else {
    }
    return
  }
  func.func @transform_0(%arg0: i32, %arg1: i32) -> (i32, i32) {
    %c0_i32 = arith.constant 0 : i32
    return %arg0, %arg1 : i32, i32
  }
  func.func @transform_1(%arg0: i32, %arg1: i32) -> (i32, i32) {
    %c0_i32 = arith.constant 0 : i32
    %c0_i32_0 = arith.constant 0 : i32
    %c0_i32_1 = arith.constant 0 : i32
    return %c0_i32, %c0_i32_0 : i32, i32
  }
  func.func @transform_2(%arg0: i32, %arg1: i32) -> (i32, i32) {
    %c0_i32 = arith.constant 0 : i32
    %c0_i32_0 = arith.constant 0 : i32
    return %arg0, %c0_i32 : i32, i32
  }
  func.func @transform_3(%arg0: i32, %arg1: i32) -> (i32, i32) {
    %c0_i32 = arith.constant 0 : i32
    %c0_i32_0 = arith.constant 0 : i32
    return %arg0, %c0_i32 : i32, i32
  }
  func.func @transform_4(%arg0: i32, %arg1: i32) -> (i32, i32) {
    %c0_i32 = arith.constant 0 : i32
    %c0_i32_0 = arith.constant 0 : i32
    return %arg0, %c0_i32 : i32, i32
  }
}

module attributes {stable_mosaic.version = 11 : i64} {
  func.func @lightgcn_layer_kernel(%arg0: i32, %arg1: i32, %arg2: memref<256x256xbf16, #tpu.memory_space<vmem>>, %arg3: memref<256x128xbf16, #tpu.memory_space<vmem>>, %arg4: memref<256x128xf32, #tpu.memory_space<vmem>>, %arg5: memref<256x128xbf16, #tpu.memory_space<vmem>>, %arg6: memref<256x128xf32, #tpu.memory_space<vmem>>, %arg7: memref<256x128xf32, #tpu.memory_space<vmem>>) attributes {dimension_semantics = [#tpu.dimension_semantics<parallel>, #tpu.dimension_semantics<arbitrary>], iteration_bounds = array<i64: 1, 1>, scalar_prefetch = 0 : i64, scratch_operands = 1 : i64, tpu.core_type = #tpu.core_type<tc>, window_params = [{transform_indices = @transform_0, window_bounds = array<i64: 256, 256>}, {pipeline_mode = #tpu.pipeline_mode<synchronous>, transform_indices = @transform_1, window_bounds = array<i64: 256, 128>}, {transform_indices = @transform_2, window_bounds = array<i64: 256, 128>}, {transform_indices = @transform_3, window_bounds = array<i64: 256, 128>}, {transform_indices = @transform_4, window_bounds = array<i64: 256, 128>}]} {
    %c0_i32 = arith.constant 0 : i32
    %0 = arith.cmpi eq, %arg1, %c0_i32 : i32
    %1 = arith.extui %0 : i1 to i32
    %c0_i32_0 = arith.constant 0 : i32
    %2 = arith.cmpi ne, %1, %c0_i32_0 : i32
    scf.if %2 {
      %cst_9 = arith.constant 0.000000e+00 : f32
      %15 = vector.broadcast %cst_9 : f32 to vector<256x128xf32>
      %c0_10 = arith.constant 0 : index
      %c0_11 = arith.constant 0 : index
      %16 = vector.load %arg7[%c0_10, %c0_11] : memref<256x128xf32, #tpu.memory_space<vmem>>, vector<256x128xf32>
      tpu.vector_store %arg7[%c0_10, %c0_11], %15 {strides = array<i32>} : memref<256x128xf32, #tpu.memory_space<vmem>>, vector<256x128xf32>,
    } else {
    }
    %c256_i32 = arith.constant 256 : i32
    %3 = arith.muli %arg1, %c256_i32 : i32
    %4 = tpu.assume_multiple %3, 256 : i32
    %5 = arith.index_cast %4 : i32 to index
    %c0 = arith.constant 0 : index
    %6 = vector.load %arg3[%5, %c0] : memref<256x128xbf16, #tpu.memory_space<vmem>>, vector<256x128xbf16>
    %c0_1 = arith.constant 0 : index
    %c0_2 = arith.constant 0 : index
    %7 = vector.load %arg7[%c0_1, %c0_2] : memref<256x128xf32, #tpu.memory_space<vmem>>, vector<256x128xf32>
    %c0_3 = arith.constant 0 : index
    %c0_4 = arith.constant 0 : index
    %8 = vector.load %arg2[%c0_3, %c0_4] : memref<256x256xbf16, #tpu.memory_space<vmem>>, vector<256x256xbf16>
    %cst = arith.constant dense<0.000000e+00> : vector<256x128xf32>
    %9 = tpu.matmul %8, %6, %cst {dimension_numbers = #tpu.dot_dimension_numbers<[1], [0], [0], [1], [0, 0, 1, 1], [], []>} : vector<256x256xbf16>, vector<256x128xbf16>, vector<256x128xf32> -> vector<256x128xf32>
    %10 = arith.addf %7, %9 : vector<256x128xf32>
    %c0_5 = arith.constant 0 : index
    %c0_6 = arith.constant 0 : index
    %11 = vector.load %arg7[%c0_5, %c0_6] : memref<256x128xf32, #tpu.memory_space<vmem>>, vector<256x128xf32>
    tpu.vector_store %arg7[%c0_5, %c0_6], %10 {strides = array<i32>} : memref<256x128xf32, #tpu.memory_space<vmem>>, vector<256x128xf32>,
    %c0_i32_7 = arith.constant 0 : i32
    %12 = arith.cmpi eq, %arg1, %c0_i32_7 : i32
    %13 = arith.extui %12 : i1 to i32
    %c0_i32_8 = arith.constant 0 : i32
    %14 = arith.cmpi ne, %13, %c0_i32_8 : i32
    scf.if %14 {
      %c0_9 = arith.constant 0 : index
      %c0_10 = arith.constant 0 : index
      %15 = vector.load %arg7[%c0_9, %c0_10] : memref<256x128xf32, #tpu.memory_space<vmem>>, vector<256x128xf32>
      %16 = arith.truncf %15 : vector<256x128xf32> to vector<256x128xbf16>
      %c0_11 = arith.constant 0 : index
      %c0_12 = arith.constant 0 : index
      %17 = vector.load %arg5[%c0_11, %c0_12] : memref<256x128xbf16, #tpu.memory_space<vmem>>, vector<256x128xbf16>
      tpu.vector_store %arg5[%c0_11, %c0_12], %16 {strides = array<i32>} : memref<256x128xbf16, #tpu.memory_space<vmem>>, vector<256x128xbf16>,
      %c0_13 = arith.constant 0 : index
      %c0_14 = arith.constant 0 : index
      %18 = vector.load %arg4[%c0_13, %c0_14] : memref<256x128xf32, #tpu.memory_space<vmem>>, vector<256x128xf32>
      %c0_15 = arith.constant 0 : index
      %c0_16 = arith.constant 0 : index
      %19 = vector.load %arg7[%c0_15, %c0_16] : memref<256x128xf32, #tpu.memory_space<vmem>>, vector<256x128xf32>
      %20 = arith.addf %18, %19 : vector<256x128xf32>
      %c0_17 = arith.constant 0 : index
      %c0_18 = arith.constant 0 : index
      %21 = vector.load %arg6[%c0_17, %c0_18] : memref<256x128xf32, #tpu.memory_space<vmem>>, vector<256x128xf32>
      tpu.vector_store %arg6[%c0_17, %c0_18], %20 {strides = array<i32>} : memref<256x128xf32, #tpu.memory_space<vmem>>, vector<256x128xf32>,
    } else {
    }
    return
  }
  func.func @transform_0(%arg0: i32, %arg1: i32) -> (i32, i32) {
    %c0_i32 = arith.constant 0 : i32
    return %arg0, %arg1 : i32, i32
  }
  func.func @transform_1(%arg0: i32, %arg1: i32) -> (i32, i32) {
    %c0_i32 = arith.constant 0 : i32
    %c0_i32_0 = arith.constant 0 : i32
    %c0_i32_1 = arith.constant 0 : i32
    return %c0_i32, %c0_i32_0 : i32, i32
  }
  func.func @transform_2(%arg0: i32, %arg1: i32) -> (i32, i32) {
    %c0_i32 = arith.constant 0 : i32
    %c0_i32_0 = arith.constant 0 : i32
    return %arg0, %c0_i32 : i32, i32
  }
  func.func @transform_3(%arg0: i32, %arg1: i32) -> (i32, i32) {
    %c0_i32 = arith.constant 0 : i32
    %c0_i32_0 = arith.constant 0 : i32
    return %arg0, %c0_i32 : i32, i32
  }
  func.func @transform_4(%arg0: i32, %arg1: i32) -> (i32, i32) {
    %c0_i32 = arith.constant 0 : i32
    %c0_i32_0 = arith.constant 0 : i32
    return %arg0, %c0_i32 : i32, i32
  }
}

</mosaic_0001>

<llo_original>
// kernel: recsys_gnn_forward.3
$region0: #{recsys_gnn_forward.3}
  #allocation0 [shape = 'u32[]', space=smem, size = 0x4, offset = 0x4, fixed_abs, tag = 'smem constant byte address 0x4 - core index']
  #allocation1 [shape = 'u32[144,128]{1,0:T(1,128)}', space=vmem, size = 0x12000, scoped, tag = 'internal scratch']
  #allocation2 [shape = 'f32[256,128]{1,0:T(8,128)}', space=vmem, size = 0x20000, scoped, tag = 'scratch operand']
  %s0 = inlined_call_operand.vmem [shape: bf16[256,256], index: 0, kind: input, shape index: {}]
  %s1 = inlined_call_operand.vmem [shape: bf16[256,128], index: 1, kind: input, shape index: {}]
  %s2 = inlined_call_operand.vmem [shape: f32[256,128], index: 2, kind: input, shape index: {}, may-alias: {2,4}]
  %s3 = inlined_call_operand.vmem [shape: bf16[256,128], index: 3, kind: output, shape index: {0}]
  %s4 = inlined_call_operand.vmem [shape: f32[256,128], index: 4, kind: output, shape index: {1}, may-alias: {2,4}]
  %5 = xla_tuple %s3, %s4
  %s6 = sld [smem:[#allocation0]]
  $region38: #{recsys_gnn_forward.3} parent=0
    _
  %s8 = ssub.s32 1, %s6
  %s9 = scalar_select 0, %s8, %s6
  // Predicated region
  $region2: #{recsys_gnn_forward.3} parent=0 // pred_check
    _
  $region3: #{recsys_gnn_forward.3} parent=0 // pred_check_branch
    %11 = sbr.rel (0) target = $region5
  $region4: #{recsys_gnn_forward.3} parent=0 // pred_region
    _
  $region5: #{recsys_gnn_forward.3} parent=0 // pred_fallthru
    _
  // Predicated region
  $region6: #{recsys_gnn_forward.3} parent=0 // pred_check
    _
  $region7: #{recsys_gnn_forward.3} parent=0 // pred_check_branch
    %13 = sbr.rel (0) target = $region9
  $region8: #{recsys_gnn_forward.3} parent=0 // pred_region
    _
  $region9: #{recsys_gnn_forward.3} parent=0 // pred_fallthru
    _
  // Predicated region
  $region10: #{recsys_gnn_forward.3} parent=0 // pred_check
    _
  $region11: #{recsys_gnn_forward.3} parent=0 // pred_check_branch
    %15 = sbr.rel (0) target = $region13
  $region12: #{recsys_gnn_forward.3} parent=0 // pred_region
    _
  $region13: #{recsys_gnn_forward.3} parent=0 // pred_fallthru
    _
  %p17 = scmp.eq.s32.totalorder 0, 0
  // Predicated region
  $region14: #{recsys_gnn_forward.3} parent=0 // pred_check
    %p18 = pneg %p17
  $region15: #{recsys_gnn_forward.3} parent=0 // pred_check_branch
    %20 = sbr.rel (%p18) target = $region17
  $region16: #{recsys_gnn_forward.3} parent=0 // pred_region
    %21 = vst [vmem:[#allocation2] sm:$0xff] 0.0
    %22 = vst [vmem:[#allocation2 + $0x8] sm:$0xff] 0.0
    %23 = vst [vmem:[#allocation2 + $0x10] sm:$0xff] 0.0
    %24 = vst [vmem:[#allocation2 + $0x18] sm:$0xff] 0.0
    %25 = vst [vmem:[#allocation2 + $0x20] sm:$0xff] 0.0
    %26 = vst [vmem:[#allocation2 + $0x28] sm:$0xff] 0.0
    %27 = vst [vmem:[#allocation2 + $0x30] sm:$0xff] 0.0
    %28 = vst [vmem:[#allocation2 + $0x38] sm:$0xff] 0.0
    %29 = vst [vmem:[#allocation2 + $0x40] sm:$0xff] 0.0
    %30 = vst [vmem:[#allocation2 + $0x48] sm:$0xff] 0.0
    %31 = vst [vmem:[#allocation2 + $0x50] sm:$0xff] 0.0
    %32 = vst [vmem:[#allocation2 + $0x58] sm:$0xff] 0.0
    %33 = vst [vmem:[#allocation2 + $0x60] sm:$0xff] 0.0
    %34 = vst [vmem:[#allocation2 + $0x68] sm:$0xff] 0.0
    %35 = vst [vmem:[#allocation2 + $0x70] sm:$0xff] 0.0
    %36 = vst [vmem:[#allocation2 + $0x78] sm:$0xff] 0.0
    %37 = vst [vmem:[#allocation2 + $0x80] sm:$0xff] 0.0
    %38 = vst [vmem:[#allocation2 + $0x88] sm:$0xff] 0.0
    %39 = vst [vmem:[#allocation2 + $0x90] sm:$0xff] 0.0
    %40 = vst [vmem:[#allocation2 + $0x98] sm:$0xff] 0.0
    %41 = vst [vmem:[#allocation2 + $0xa0] sm:$0xff] 0.0
    %42 = vst [vmem:[#allocation2 + $0xa8] sm:$0xff] 0.0
    %43 = vst [vmem:[#allocation2 + $0xb0] sm:$0xff] 0.0
    %44 = vst [vmem:[#allocation2 + $0xb8] sm:$0xff] 0.0
    %45 = vst [vmem:[#allocation2 + $0xc0] sm:$0xff] 0.0
    %46 = vst [vmem:[#allocation2 + $0xc8] sm:$0xff] 0.0
    %47 = vst [vmem:[#allocation2 + $0xd0] sm:$0xff] 0.0
    %48 = vst [vmem:[#allocation2 + $0xd8] sm:$0xff] 0.0
    %49 = vst [vmem:[#allocation2 + $0xe0] sm:$0xff] 0.0
    %50 = vst [vmem:[#allocation2 + $0xe8] sm:$0xff] 0.0
    %51 = vst [vmem:[#allocation2 + $0xf0] sm:$0xff] 0.0
    %52 = vst [vmem:[#allocation2 + $0xf8] sm:$0xff] 0.0
  $region17: #{recsys_gnn_forward.3} parent=0 // pred_fallthru
    _
  %s53 = smul.u32 0, 256
  %s54 = sshra.s32 %s53, 3
  %s55 = sand.u32 %s53, 7
  %s56 = smul.addr %s54, 4
  %s57 = scalar_lea.vmem %s1, %s56
  %v58 = vld [vmem:[%s57] sm:$0xf]
  %v59 = vld [vmem:[%s57 + $0x4] sm:$0xf]
  %v60 = vld [vmem:[%s57 + $0x8] sm:$0xf]
  %v61 = vld [vmem:[%s57 + $0xc] sm:$0xf]
  %v62 = vld [vmem:[%s57 + $0x10] sm:$0xf]
  %v63 = vld [vmem:[%s57 + $0x14] sm:$0xf]
  %v64 = vld [vmem:[%s57 + $0x18] sm:$0xf]
  %v65 = vld [vmem:[%s57 + $0x1c] sm:$0xf]
  %v66 = vld [vmem:[%s57 + $0x20] sm:$0xf]
  %v67 = vld [vmem:[%s57 + $0x24] sm:$0xf]
  %v68 = vld [vmem:[%s57 + $0x28] sm:$0xf]
  %v69 = vld [vmem:[%s57 + $0x2c] sm:$0xf]
  %v70 = vld [vmem:[%s57 + $0x30] sm:$0xf]
  %v71 = vld [vmem:[%s57 + $0x34] sm:$0xf]
  %v72 = vld [vmem:[%s57 + $0x38] sm:$0xf]
  %v73 = vld [vmem:[%s57 + $0x3c] sm:$0xf]
  %v74 = vld [vmem:[%s57 + $0x40] sm:$0xf]
  %v75 = vld [vmem:[%s57 + $0x44] sm:$0xf]
  %v76 = vld [vmem:[%s57 + $0x48] sm:$0xf]
  %v77 = vld [vmem:[%s57 + $0x4c] sm:$0xf]
  %v78 = vld [vmem:[%s57 + $0x50] sm:$0xf]
  %v79 = vld [vmem:[%s57 + $0x54] sm:$0xf]
  %v80 = vld [vmem:[%s57 + $0x58] sm:$0xf]
  %v81 = vld [vmem:[%s57 + $0x5c] sm:$0xf]
  %v82 = vld [vmem:[%s57 + $0x60] sm:$0xf]
  %v83 = vld [vmem:[%s57 + $0x64] sm:$0xf]
  %v84 = vld [vmem:[%s57 + $0x68] sm:$0xf]
  %v85 = vld [vmem:[%s57 + $0x6c] sm:$0xf]
  %v86 = vld [vmem:[%s57 + $0x70] sm:$0xf]
  %v87 = vld [vmem:[%s57 + $0x74] sm:$0xf]
  %v88 = vld [vmem:[%s57 + $0x78] sm:$0xf]
  %v89 = vld [vmem:[%s57 + $0x7c] sm:$0xf]
  %v90 = vld [vmem:[#allocation2] sm:$0xff]
  %v91 = vld [vmem:[#allocation2 + $0x8] sm:$0xff]
  %v92 = vld [vmem:[#allocation2 + $0x10] sm:$0xff]
  %v93 = vld [vmem:[#allocation2 + $0x18] sm:$0xff]
  %v94 = vld [vmem:[#allocation2 + $0x20] sm:$0xff]
  %v95 = vld [vmem:[#allocation2 + $0x28] sm:$0xff]
  %v96 = vld [vmem:[#allocation2 + $0x30] sm:$0xff]
  %v97 = vld [vmem:[#allocation2 + $0x38] sm:$0xff]
  %v98 = vld [vmem:[#allocation2 + $0x40] sm:$0xff]
  %v99 = vld [vmem:[#allocation2 + $0x48] sm:$0xff]
  %v100 = vld [vmem:[#allocation2 + $0x50] sm:$0xff]
  %v101 = vld [vmem:[#allocation2 + $0x58] sm:$0xff]
  %v102 = vld [vmem:[#allocation2 + $0x60] sm:$0xff]
  %v103 = vld [vmem:[#allocation2 + $0x68] sm:$0xff]
  %v104 = vld [vmem:[#allocation2 + $0x70] sm:$0xff]
  %v105 = vld [vmem:[#allocation2 + $0x78] sm:$0xff]
  %v106 = vld [vmem:[#allocation2 + $0x80] sm:$0xff]
  %v107 = vld [vmem:[#allocation2 + $0x88] sm:$0xff]
  %v108 = vld [vmem:[#allocation2 + $0x90] sm:$0xff]
  %v109 = vld [vmem:[#allocation2 + $0x98] sm:$0xff]
  %v110 = vld [vmem:[#allocation2 + $0xa0] sm:$0xff]
  %v111 = vld [vmem:[#allocation2 + $0xa8] sm:$0xff]
  %v112 = vld [vmem:[#allocation2 + $0xb0] sm:$0xff]
  %v113 = vld [vmem:[#allocation2 + $0xb8] sm:$0xff]
  %v114 = vld [vmem:[#allocation2 + $0xc0] sm:$0xff]
  %v115 = vld [vmem:[#allocation2 + $0xc8] sm:$0xff]
  %v116 = vld [vmem:[#allocation2 + $0xd0] sm:$0xff]
  %v117 = vld [vmem:[#allocation2 + $0xd8] sm:$0xff]
  %v118 = vld [vmem:[#allocation2 + $0xe0] sm:$0xff]
  %v119 = vld [vmem:[#allocation2 + $0xe8] sm:$0xff]
  %v120 = vld [vmem:[#allocation2 + $0xf0] sm:$0xff]
  %v121 = vld [vmem:[#allocation2 + $0xf8] sm:$0xff]
  %v122 = vld [vmem:[%s0] sm:$0xff]
  %v123 = vld [vmem:[%s0 + $0x8] sm:$0xff]
  %v124 = vld [vmem:[%s0 + $0x10] sm:$0xff]
  %v125 = vld [vmem:[%s0 + $0x18] sm:$0xff]
  %v126 = vld [vmem:[%s0 + $0x20] sm:$0xff]
  %v127 = vld [vmem:[%s0 + $0x28] sm:$0xff]
  %v128 = vld [vmem:[%s0 + $0x30] sm:$0xff]
  %v129 = vld [vmem:[%s0 + $0x38] sm:$0xff]
  %v130 = vld [vmem:[%s0 + $0x40] sm:$0xff]
  %v131 = vld [vmem:[%s0 + $0x48] sm:$0xff]
  %v132 = vld [vmem:[%s0 + $0x50] sm:$0xff]
  %v133 = vld [vmem:[%s0 + $0x58] sm:$0xff]
  %v134 = vld [vmem:[%s0 + $0x60] sm:$0xff]
  %v135 = vld [vmem:[%s0 + $0x68] sm:$0xff]
  %v136 = vld [vmem:[%s0 + $0x70] sm:$0xff]
  %v137 = vld [vmem:[%s0 + $0x78] sm:$0xff]
  %v138 = vld [vmem:[%s0 + $0x80] sm:$0xff]
  %v139 = vld [vmem:[%s0 + $0x88] sm:$0xff]
  %v140 = vld [vmem:[%s0 + $0x90] sm:$0xff]
  %v141 = vld [vmem:[%s0 + $0x98] sm:$0xff]
  %v142 = vld [vmem:[%s0 + $0xa0] sm:$0xff]
  %v143 = vld [vmem:[%s0 + $0xa8] sm:$0xff]
  %v144 = vld [vmem:[%s0 + $0xb0] sm:$0xff]
  %v145 = vld [vmem:[%s0 + $0xb8] sm:$0xff]
  %v146 = vld [vmem:[%s0 + $0xc0] sm:$0xff]
  %v147 = vld [vmem:[%s0 + $0xc8] sm:$0xff]
  %v148 = vld [vmem:[%s0 + $0xd0] sm:$0xff]
  %v149 = vld [vmem:[%s0 + $0xd8] sm:$0xff]
  %v150 = vld [vmem:[%s0 + $0xe0] sm:$0xff]
  %v151 = vld [vmem:[%s0 + $0xe8] sm:$0xff]
  %v152 = vld [vmem:[%s0 + $0xf0] sm:$0xff]
  %v153 = vld [vmem:[%s0 + $0xf8] sm:$0xff]
  %v186 = vunpack.c.l.b16 %v122
  %v187 = vunpack.c.h.b16 %v122
  %v188 = vunpack.c.l.b16 %v123
  %v189 = vunpack.c.h.b16 %v123
  %v190 = vunpack.c.l.b16 %v124
  %v191 = vunpack.c.h.b16 %v124
  %v192 = vunpack.c.l.b16 %v125
  %v193 = vunpack.c.h.b16 %v125
  %v194 = vunpack.c.l.b16 %v126
  %v195 = vunpack.c.h.b16 %v126
  %v196 = vunpack.c.l.b16 %v127
  %v197 = vunpack.c.h.b16 %v127
  %v198 = vunpack.c.l.b16 %v128
  %v199 = vunpack.c.h.b16 %v128
  %v200 = vunpack.c.l.b16 %v129
  %v201 = vunpack.c.h.b16 %v129
  %v202 = vunpack.c.l.b16 %v130
  %v203 = vunpack.c.h.b16 %v130
  %v204 = vunpack.c.l.b16 %v131
  %v205 = vunpack.c.h.b16 %v131
  %v206 = vunpack.c.l.b16 %v132
  %v207 = vunpack.c.h.b16 %v132
  %v208 = vunpack.c.l.b16 %v133
  %v209 = vunpack.c.h.b16 %v133
  %v210 = vunpack.c.l.b16 %v134
  %v211 = vunpack.c.h.b16 %v134
  %v212 = vunpack.c.l.b16 %v135
  %v213 = vunpack.c.h.b16 %v135
  %v214 = vunpack.c.l.b16 %v136
  %v215 = vunpack.c.h.b16 %v136
  %v216 = vunpack.c.l.b16 %v137
  %v217 = vunpack.c.h.b16 %v137
  %v218 = vunpack.c.l.b16 %v138
  %v219 = vunpack.c.h.b16 %v138
  %v220 = vunpack.c.l.b16 %v139
  %v221 = vunpack.c.h.b16 %v139
  %v222 = vunpack.c.l.b16 %v140
  %v223 = vunpack.c.h.b16 %v140
  %v224 = vunpack.c.l.b16 %v141
  %v225 = vunpack.c.h.b16 %v141
  %v226 = vunpack.c.l.b16 %v142
  %v227 = vunpack.c.h.b16 %v142
  %v228 = vunpack.c.l.b16 %v143
  %v229 = vunpack.c.h.b16 %v143
  %v230 = vunpack.c.l.b16 %v144
  %v231 = vunpack.c.h.b16 %v144
  %v232 = vunpack.c.l.b16 %v145
  %v233 = vunpack.c.h.b16 %v145
  %v234 = vunpack.c.l.b16 %v146
  %v235 = vunpack.c.h.b16 %v146
  %v236 = vunpack.c.l.b16 %v147
  %v237 = vunpack.c.h.b16 %v147
  %v238 = vunpack.c.l.b16 %v148
  %v239 = vunpack.c.h.b16 %v148
  %v240 = vunpack.c.l.b16 %v149
  %v241 = vunpack.c.h.b16 %v149
  %v242 = vunpack.c.l.b16 %v150
  %v243 = vunpack.c.h.b16 %v150
  %v244 = vunpack.c.l.b16 %v151
  %v245 = vunpack.c.h.b16 %v151
  %v246 = vunpack.c.l.b16 %v152
  %v247 = vunpack.c.h.b16 %v152
  %v248 = vunpack.c.l.b16 %v153
  %v249 = vunpack.c.h.b16 %v153
  %v250 = vpack.c.b16 %v188, %v186
  %v251 = vpack.c.b16 %v189, %v187
  %v252 = vpack.c.b16 %v192, %v190
  %v253 = vpack.c.b16 %v193, %v191
  %v254 = vpack.c.b16 %v196, %v194
  %v255 = vpack.c.b16 %v197, %v195
  %v256 = vpack.c.b16 %v200, %v198
  %v257 = vpack.c.b16 %v201, %v199
  %v258 = vpack.c.b16 %v204, %v202
  %v259 = vpack.c.b16 %v205, %v203
  %v260 = vpack.c.b16 %v208, %v206
  %v261 = vpack.c.b16 %v209, %v207
  %v262 = vpack.c.b16 %v212, %v210
  %v263 = vpack.c.b16 %v213, %v211
  %v264 = vpack.c.b16 %v216, %v214
  %v265 = vpack.c.b16 %v217, %v215
  %v266 = vpack.c.b16 %v220, %v218
  %v267 = vpack.c.b16 %v221, %v219
  %v268 = vpack.c.b16 %v224, %v222
  %v269 = vpack.c.b16 %v225, %v223
  %v270 = vpack.c.b16 %v228, %v226
  %v271 = vpack.c.b16 %v229, %v227
  %v272 = vpack.c.b16 %v232, %v230
  %v273 = vpack.c.b16 %v233, %v231
  %v274 = vpack.c.b16 %v236, %v234
  %v275 = vpack.c.b16 %v237, %v235
  %v276 = vpack.c.b16 %v240, %v238
  %v277 = vpack.c.b16 %v241, %v239
  %v278 = vpack.c.b16 %v244, %v242
  %v279 = vpack.c.b16 %v245, %v243
  %v280 = vpack.c.b16 %v248, %v246
  %v281 = vpack.c.b16 %v249, %v247
  %v346 = vunpack.c.l.b16 %v58
  %v347 = vunpack.c.l.b16 %v59
  %v348 = vunpack.c.l.b16 %v60
  %v349 = vunpack.c.l.b16 %v61
  %v350 = vunpack.c.l.b16 %v62
  %v351 = vunpack.c.l.b16 %v63
  %v352 = vunpack.c.l.b16 %v64
  %v353 = vunpack.c.l.b16 %v65
  %v354 = vunpack.c.l.b16 %v66
  %v355 = vunpack.c.l.b16 %v67
  %v356 = vunpack.c.l.b16 %v68
  %v357 = vunpack.c.l.b16 %v69
  %v358 = vunpack.c.l.b16 %v70
  %v359 = vunpack.c.l.b16 %v71
  %v360 = vunpack.c.l.b16 %v72
  %v361 = vunpack.c.l.b16 %v73
  %v362 = vunpack.c.l.b16 %v74
  %v363 = vunpack.c.l.b16 %v75
  %v364 = vunpack.c.l.b16 %v76
  %v365 = vunpack.c.l.b16 %v77
  %v366 = vunpack.c.l.b16 %v78
  %v367 = vunpack.c.l.b16 %v79
  %v368 = vunpack.c.l.b16 %v80
  %v369 = vunpack.c.l.b16 %v81
  %v370 = vunpack.c.l.b16 %v82
  %v371 = vunpack.c.l.b16 %v83
  %v372 = vunpack.c.l.b16 %v84
  %v373 = vunpack.c.l.b16 %v85
  %v374 = vunpack.c.l.b16 %v86
  %v375 = vunpack.c.l.b16 %v87
  %v376 = vunpack.c.l.b16 %v88
  %v377 = vunpack.c.l.b16 %v89
  %v378 = vpack.c.b16 %v347, %v346
  %v379 = vpack.c.b16 %v349, %v348
  %v380 = vpack.c.b16 %v351, %v350
  %v381 = vpack.c.b16 %v353, %v352
  %v382 = vpack.c.b16 %v355, %v354
  %v383 = vpack.c.b16 %v357, %v356
  %v384 = vpack.c.b16 %v359, %v358
  %v385 = vpack.c.b16 %v361, %v360
  %v386 = vpack.c.b16 %v363, %v362
  %v387 = vpack.c.b16 %v365, %v364
  %v388 = vpack.c.b16 %v367, %v366
  %v389 = vpack.c.b16 %v369, %v368
  %v390 = vpack.c.b16 %v371, %v370
  %v391 = vpack.c.b16 %v373, %v372
  %v392 = vpack.c.b16 %v375, %v374
  %v393 = vpack.c.b16 %v377, %v376
  %410 = vmatprep.subr.bf16.mxu0 0
  %411 = vmatpush1.bf16.msra.mxu0 %v378
  %412 = vmatprep.subr.bf16.mxu0 0
  %413 = vmatpush1.bf16.msra.mxu0 %v379
  %414 = vmatprep.subr.bf16.mxu0 0
  %415 = vmatpush1.bf16.msra.mxu0 %v380
  %416 = vmatprep.subr.bf16.mxu0 0
  %417 = vmatpush1.bf16.msra.mxu0 %v381
  %418 = vmatprep.subr.bf16.mxu0 0
  %419 = vmatpush1.bf16.msra.mxu0 %v382
  %420 = vmatprep.subr.bf16.mxu0 0
  %421 = vmatpush1.bf16.msra.mxu0 %v383
  %422 = vmatprep.subr.bf16.mxu0 0
  %423 = vmatpush1.bf16.msra.mxu0 %v384
  %424 = vmatprep.subr.bf16.mxu0 0
  %425 = vmatpush1.bf16.msra.mxu0 %v385
  %426 = vmatprep.subr.bf16.mxu0 0
  %427 = vmatpush1.bf16.msra.mxu0 %v386
  %428 = vmatprep.subr.bf16.mxu0 0
  %429 = vmatpush1.bf16.msra.mxu0 %v387
  %430 = vmatprep.subr.bf16.mxu0 0
  %431 = vmatpush1.bf16.msra.mxu0 %v388
  %432 = vmatprep.subr.bf16.mxu0 0
  %433 = vmatpush1.bf16.msra.mxu0 %v389
  %434 = vmatprep.subr.bf16.mxu0 0
  %435 = vmatpush1.bf16.msra.mxu0 %v390
  %436 = vmatprep.subr.bf16.mxu0 0
  %437 = vmatpush1.bf16.msra.mxu0 %v391
  %438 = vmatprep.subr.bf16.mxu0 0
  %439 = vmatpush1.bf16.msra.mxu0 %v392
  %440 = vmatprep.subr.bf16.mxu0 0
  %441 = vmatpush1.bf16.msra.mxu0 %v393
  %442 = vmatprep.mubr.bf16.mxu0 %v251
  %443 = vmatmul.mubr.bf16.gmra.mrb[0].mxu0 %v250
  %v444 = vpop.f32.mrb[0].mxu0
  %v445 = vadd.f32 0.0, %v444
  %v446 = vpop.f32.mrb[0].mxu0
  %v447 = vpop.f32.mrb[0].mxu0
  %v448 = vadd.f32 0.0, %v447
  %v449 = vpop.f32.mrb[0].mxu0
  %450 = vmatprep.mubr.bf16.mxu0 %v253
  %451 = vmatmul.mubr.bf16.gmra.mrb[0].mxu0 %v252
  %v452 = vpop.f32.mrb[0].mxu0
  %v453 = vadd.f32 0.0, %v452
  %v454 = vpop.f32.mrb[0].mxu0
  %v455 = vpop.f32.mrb[0].mxu0
  %v456 = vadd.f32 0.0, %v455
  %v457 = vpop.f32.mrb[0].mxu0
  %458 = vmatprep.mubr.bf16.mxu0 %v255
  %459 = vmatmul.mubr.bf16.gmra.mrb[0].mxu0 %v254
  %v460 = vpop.f32.mrb[0].mxu0
  %v461 = vadd.f32 0.0, %v460
  %v462 = vpop.f32.mrb[0].mxu0
  %v463 = vpop.f32.mrb[0].mxu0
  %v464 = vadd.f32 0.0, %v463
  %v465 = vpop.f32.mrb[0].mxu0
  %466 = vmatprep.mubr.bf16.mxu0 %v257
  %467 = vmatmul.mubr.bf16.gmra.mrb[0].mxu0 %v256
  %v468 = vpop.f32.mrb[0].mxu0
  %v469 = vadd.f32 0.0, %v468
  %v470 = vpop.f32.mrb[0].mxu0
  %v471 = vpop.f32.mrb[0].mxu0
  %v472 = vadd.f32 0.0, %v471
  %v473 = vpop.f32.mrb[0].mxu0
  %474 = vmatprep.mubr.bf16.mxu0 %v259
  %475 = vmatmul.mubr.bf16.gmra.mrb[0].mxu0 %v258
  %v476 = vpop.f32.mrb[0].mxu0
  %v477 = vadd.f32 0.0, %v476
  %v478 = vpop.f32.mrb[0].mxu0
  %v479 = vpop.f32.mrb[0].mxu0
  %v480 = vadd.f32 0.0, %v479
  %v481 = vpop.f32.mrb[0].mxu0
  %482 = vmatprep.mubr.bf16.mxu0 %v261
  %483 = vmatmul.mubr.bf16.gmra.mrb[0].mxu0 %v260
  %v484 = vpop.f32.mrb[0].mxu0
  %v485 = vadd.f32 0.0, %v484
  %v486 = vpop.f32.mrb[0].mxu0
  %v487 = vpop.f32.mrb[0].mxu0
  %v488 = vadd.f32 0.0, %v487
  %v489 = vpop.f32.mrb[0].mxu0
  %490 = vmatprep.mubr.bf16.mxu0 %v263
  %491 = vmatmul.mubr.bf16.gmra.mrb[0].mxu0 %v262
  %v492 = vpop.f32.mrb[0].mxu0
  %v493 = vadd.f32 0.0, %v492
  %v494 = vpop.f32.mrb[0].mxu0
  %v495 = vpop.f32.mrb[0].mxu0
  %v496 = vadd.f32 0.0, %v495
  %v497 = vpop.f32.mrb[0].mxu0
  %498 = vmatprep.mubr.bf16.mxu0 %v265
  %499 = vmatmul.mubr.bf16.gmra.mrb[0].mxu0 %v264
  %v500 = vpop.f32.mrb[0].mxu0
  %v501 = vadd.f32 0.0, %v500
  %v502 = vpop.f32.mrb[0].mxu0
  %v503 = vpop.f32.mrb[0].mxu0
  %v504 = vadd.f32 0.0, %v503
  %v505 = vpop.f32.mrb[0].mxu0
  %506 = vmatprep.mubr.bf16.mxu0 %v267
  %507 = vmatmul.mubr.bf16.gmra.mrb[0].mxu0 %v266
  %v508 = vpop.f32.mrb[0].mxu0
  %v509 = vadd.f32 0.0, %v508
  %v510 = vpop.f32.mrb[0].mxu0
  %v511 = vpop.f32.mrb[0].mxu0
  %v512 = vadd.f32 0.0, %v511
  %v513 = vpop.f32.mrb[0].mxu0
  %514 = vmatprep.mubr.bf16.mxu0 %v269
  %515 = vmatmul.mubr.bf16.gmra.mrb[0].mxu0 %v268
  %v516 = vpop.f32.mrb[0].mxu0
  %v517 = vadd.f32 0.0, %v516
  %v518 = vpop.f32.mrb[0].mxu0
  %v519 = vpop.f32.mrb[0].mxu0
  %v520 = vadd.f32 0.0, %v519
  %v521 = vpop.f32.mrb[0].mxu0
  %522 = vmatprep.mubr.bf16.mxu0 %v271
  %523 = vmatmul.mubr.bf16.gmra.mrb[0].mxu0 %v270
  %v524 = vpop.f32.mrb[0].mxu0
  %v525 = vadd.f32 0.0, %v524
  %v526 = vpop.f32.mrb[0].mxu0
  %v527 = vpop.f32.mrb[0].mxu0
  %v528 = vadd.f32 0.0, %v527
  %v529 = vpop.f32.mrb[0].mxu0
  %530 = vmatprep.mubr.bf16.mxu0 %v273
  %531 = vmatmul.mubr.bf16.gmra.mrb[0].mxu0 %v272
  %v532 = vpop.f32.mrb[0].mxu0
  %v533 = vadd.f32 0.0, %v532
  %v534 = vpop.f32.mrb[0].mxu0
  %v535 = vpop.f32.mrb[0].mxu0
  %v536 = vadd.f32 0.0, %v535
  %v537 = vpop.f32.mrb[0].mxu0
  %538 = vmatprep.mubr.bf16.mxu0 %v275
  %539 = vmatmul.mubr.bf16.gmra.mrb[0].mxu0 %v274
  %v540 = vpop.f32.mrb[0].mxu0
  %v541 = vadd.f32 0.0, %v540
  %v542 = vpop.f32.mrb[0].mxu0
  %v543 = vpop.f32.mrb[0].mxu0
  %v544 = vadd.f32 0.0, %v543
  %v545 = vpop.f32.mrb[0].mxu0
  %546 = vmatprep.mubr.bf16.mxu0 %v277
  %547 = vmatmul.mubr.bf16.gmra.mrb[0].mxu0 %v276
  %v548 = vpop.f32.mrb[0].mxu0
  %v549 = vadd.f32 0.0, %v548
  %v550 = vpop.f32.mrb[0].mxu0
  %v551 = vpop.f32.mrb[0].mxu0
  %v552 = vadd.f32 0.0, %v551
  %v553 = vpop.f32.mrb[0].mxu0
  %554 = vmatprep.mubr.bf16.mxu0 %v279
  %555 = vmatmul.mubr.bf16.gmra.mrb[0].mxu0 %v278
  %v556 = vpop.f32.mrb[0].mxu0
  %v557 = vadd.f32 0.0, %v556
  %v558 = vpop.f32.mrb[0].mxu0
  %v559 = vpop.f32.mrb[0].mxu0
  %v560 = vadd.f32 0.0, %v559
  %v561 = vpop.f32.mrb[0].mxu0
  %562 = vmatprep.mubr.bf16.mxu0 %v281
  %563 = vmatmul.mubr.bf16.gmra.mrb[0].mxu0 %v280
  %v564 = vpop.f32.mrb[0].mxu0
  %v565 = vadd.f32 0.0, %v564
  %v566 = vpop.f32.mrb[0].mxu0
  %v567 = vpop.f32.mrb[0].mxu0
  %v568 = vadd.f32 0.0, %v567
  %v569 = vpop.f32.mrb[0].mxu0
  %570 = vdwg.mxu0
  %v571 = vadd.f32 %v90, %v445
  %v572 = vadd.f32 %v91, %v448
  %v573 = vadd.f32 %v92, %v453
  %v574 = vadd.f32 %v93, %v456
  %v575 = vadd.f32 %v94, %v461
  %v576 = vadd.f32 %v95, %v464
  %v577 = vadd.f32 %v96, %v469
  %v578 = vadd.f32 %v97, %v472
  %v579 = vadd.f32 %v98, %v477
  %v580 = vadd.f32 %v99, %v480
  %v581 = vadd.f32 %v100, %v485
  %v582 = vadd.f32 %v101, %v488
  %v583 = vadd.f32 %v102, %v493
  %v584 = vadd.f32 %v103, %v496
  %v585 = vadd.f32 %v104, %v501
  %v586 = vadd.f32 %v105, %v504
  %v587 = vadd.f32 %v106, %v509
  %v588 = vadd.f32 %v107, %v512
  %v589 = vadd.f32 %v108, %v517
  %v590 = vadd.f32 %v109, %v520
  %v591 = vadd.f32 %v110, %v525
  %v592 = vadd.f32 %v111, %v528
  %v593 = vadd.f32 %v112, %v533
  %v594 = vadd.f32 %v113, %v536
  %v595 = vadd.f32 %v114, %v541
  %v596 = vadd.f32 %v115, %v544
  %v597 = vadd.f32 %v116, %v549
  %v598 = vadd.f32 %v117, %v552
  %v599 = vadd.f32 %v118, %v557
  %v600 = vadd.f32 %v119, %v560
  %v601 = vadd.f32 %v120, %v565
  %v602 = vadd.f32 %v121, %v568
  %603 = vst [vmem:[#allocation2] sm:$0xff] %v571
  %604 = vst [vmem:[#allocation2 + $0x8] sm:$0xff] %v572
  %605 = vst [vmem:[#allocation2 + $0x10] sm:$0xff] %v573
  %606 = vst [vmem:[#allocation2 + $0x18] sm:$0xff] %v574
  %607 = vst [vmem:[#allocation2 + $0x20] sm:$0xff] %v575
  %608 = vst [vmem:[#allocation2 + $0x28] sm:$0xff] %v576
  %609 = vst [vmem:[#allocation2 + $0x30] sm:$0xff] %v577
  %610 = vst [vmem:[#allocation2 + $0x38] sm:$0xff] %v578
  %611 = vst [vmem:[#allocation2 + $0x40] sm:$0xff] %v579
  %612 = vst [vmem:[#allocation2 + $0x48] sm:$0xff] %v580
  %613 = vst [vmem:[#allocation2 + $0x50] sm:$0xff] %v581
  %614 = vst [vmem:[#allocation2 + $0x58] sm:$0xff] %v582
  %615 = vst [vmem:[#allocation2 + $0x60] sm:$0xff] %v583
  %616 = vst [vmem:[#allocation2 + $0x68] sm:$0xff] %v584
  %617 = vst [vmem:[#allocation2 + $0x70] sm:$0xff] %v585
  %618 = vst [vmem:[#allocation2 + $0x78] sm:$0xff] %v586
  %619 = vst [vmem:[#allocation2 + $0x80] sm:$0xff] %v587
  %620 = vst [vmem:[#allocation2 + $0x88] sm:$0xff] %v588
  %621 = vst [vmem:[#allocation2 + $0x90] sm:$0xff] %v589
  %622 = vst [vmem:[#allocation2 + $0x98] sm:$0xff] %v590
  %623 = vst [vmem:[#allocation2 + $0xa0] sm:$0xff] %v591
  %624 = vst [vmem:[#allocation2 + $0xa8] sm:$0xff] %v592
  %625 = vst [vmem:[#allocation2 + $0xb0] sm:$0xff] %v593
  %626 = vst [vmem:[#allocation2 + $0xb8] sm:$0xff] %v594
  %627 = vst [vmem:[#allocation2 + $0xc0] sm:$0xff] %v595
  %628 = vst [vmem:[#allocation2 + $0xc8] sm:$0xff] %v596
  %629 = vst [vmem:[#allocation2 + $0xd0] sm:$0xff] %v597
  %630 = vst [vmem:[#allocation2 + $0xd8] sm:$0xff] %v598
  %631 = vst [vmem:[#allocation2 + $0xe0] sm:$0xff] %v599
  %632 = vst [vmem:[#allocation2 + $0xe8] sm:$0xff] %v600
  %633 = vst [vmem:[#allocation2 + $0xf0] sm:$0xff] %v601
  %634 = vst [vmem:[#allocation2 + $0xf8] sm:$0xff] %v602
  // Predicated region
  $region18: #{recsys_gnn_forward.3} parent=0 // pred_check
    %p635 = pneg %p17
  $region19: #{recsys_gnn_forward.3} parent=0 // pred_check_branch
    %637 = sbr.rel (%p635) target = $region21
  $region20: #{recsys_gnn_forward.3} parent=0 // pred_region
    %v638 = vld [vmem:[#allocation2] sm:$0xff]
    %v639 = vld [vmem:[#allocation2 + $0x8] sm:$0xff]
    %v640 = vld [vmem:[#allocation2 + $0x10] sm:$0xff]
    %v641 = vld [vmem:[#allocation2 + $0x18] sm:$0xff]
    %v642 = vld [vmem:[#allocation2 + $0x20] sm:$0xff]
    %v643 = vld [vmem:[#allocation2 + $0x28] sm:$0xff]
    %v644 = vld [vmem:[#allocation2 + $0x30] sm:$0xff]
    %v645 = vld [vmem:[#allocation2 + $0x38] sm:$0xff]
    %v646 = vld [vmem:[#allocation2 + $0x40] sm:$0xff]
    %v647 = vld [vmem:[#allocation2 + $0x48] sm:$0xff]
    %v648 = vld [vmem:[#allocation2 + $0x50] sm:$0xff]
    %v649 = vld [vmem:[#allocation2 + $0x58] sm:$0xff]
    %v650 = vld [vmem:[#allocation2 + $0x60] sm:$0xff]
    %v651 = vld [vmem:[#allocation2 + $0x68] sm:$0xff]
    %v652 = vld [vmem:[#allocation2 + $0x70] sm:$0xff]
    %v653 = vld [vmem:[#allocation2 + $0x78] sm:$0xff]
    %v654 = vld [vmem:[#allocation2 + $0x80] sm:$0xff]
    %v655 = vld [vmem:[#allocation2 + $0x88] sm:$0xff]
    %v656 = vld [vmem:[#allocation2 + $0x90] sm:$0xff]
    %v657 = vld [vmem:[#allocation2 + $0x98] sm:$0xff]
    %v658 = vld [vmem:[#allocation2 + $0xa0] sm:$0xff]
    %v659 = vld [vmem:[#allocation2 + $0xa8] sm:$0xff]
    %v660 = vld [vmem:[#allocation2 + $0xb0] sm:$0xff]
    %v661 = vld [vmem:[#allocation2 + $0xb8] sm:$0xff]
    %v662 = vld [vmem:[#allocation2 + $0xc0] sm:$0xff]
    %v663 = vld [vmem:[#allocation2 + $0xc8] sm:$0xff]
    %v664 = vld [vmem:[#allocation2 + $0xd0] sm:$0xff]
    %v665 = vld [vmem:[#allocation2 + $0xd8] sm:$0xff]
    %v666 = vld [vmem:[#allocation2 + $0xe0] sm:$0xff]
    %v667 = vld [vmem:[#allocation2 + $0xe8] sm:$0xff]
    %v668 = vld [vmem:[#allocation2 + $0xf0] sm:$0xff]
    %v669 = vld [vmem:[#allocation2 + $0xf8] sm:$0xff]
    %v670 = vpack.c.bf16 %v639, %v638
    %v671 = vpack.c.bf16 %v641, %v640
    %v672 = vpack.c.bf16 %v643, %v642
    %v673 = vpack.c.bf16 %v645, %v644
    %v674 = vpack.c.bf16 %v647, %v646
    %v675 = vpack.c.bf16 %v649, %v648
    %v676 = vpack.c.bf16 %v651, %v650
    %v677 = vpack.c.bf16 %v653, %v652
    %v678 = vpack.c.bf16 %v655, %v654
    %v679 = vpack.c.bf16 %v657, %v656
    %v680 = vpack.c.bf16 %v659, %v658
    %v681 = vpack.c.bf16 %v661, %v660
    %v682 = vpack.c.bf16 %v663, %v662
    %v683 = vpack.c.bf16 %v665, %v664
    %v684 = vpack.c.bf16 %v667, %v666
    %v685 = vpack.c.bf16 %v669, %v668
    %v702 = vunpack.c.l.b16 %v670
    %v703 = vunpack.c.h.b16 %v670
    %v704 = vunpack.c.l.b16 %v671
    %v705 = vunpack.c.h.b16 %v671
    %v706 = vunpack.c.l.b16 %v672
    %v707 = vunpack.c.h.b16 %v672
    %v708 = vunpack.c.l.b16 %v673
    %v709 = vunpack.c.h.b16 %v673
    %v710 = vunpack.c.l.b16 %v674
    %v711 = vunpack.c.h.b16 %v674
    %v712 = vunpack.c.l.b16 %v675
    %v713 = vunpack.c.h.b16 %v675
    %v714 = vunpack.c.l.b16 %v676
    %v715 = vunpack.c.h.b16 %v676
    %v716 = vunpack.c.l.b16 %v677
    %v717 = vunpack.c.h.b16 %v677
    %v718 = vunpack.c.l.b16 %v678
    %v719 = vunpack.c.h.b16 %v678
    %v720 = vunpack.c.l.b16 %v679
    %v721 = vunpack.c.h.b16 %v679
    %v722 = vunpack.c.l.b16 %v680
    %v723 = vunpack.c.h.b16 %v680
    %v724 = vunpack.c.l.b16 %v681
    %v725 = vunpack.c.h.b16 %v681
    %v726 = vunpack.c.l.b16 %v682
    %v727 = vunpack.c.h.b16 %v682
    %v728 = vunpack.c.l.b16 %v683
    %v729 = vunpack.c.h.b16 %v683
    %v730 = vunpack.c.l.b16 %v684
    %v731 = vunpack.c.h.b16 %v684
    %v732 = vunpack.c.l.b16 %v685
    %v733 = vunpack.c.h.b16 %v685
    %v734 = vpack.c.b16 %v702, %v702
    %v735 = vpack.c.b16 %v703, %v703
    %v736 = vpack.c.b16 %v704, %v704
    %v737 = vpack.c.b16 %v705, %v705
    %v738 = vpack.c.b16 %v706, %v706
    %v739 = vpack.c.b16 %v707, %v707
    %v740 = vpack.c.b16 %v708, %v708
    %v741 = vpack.c.b16 %v709, %v709
    %v742 = vpack.c.b16 %v710, %v710
    %v743 = vpack.c.b16 %v711, %v711
    %v744 = vpack.c.b16 %v712, %v712
    %v745 = vpack.c.b16 %v713, %v713
    %v746 = vpack.c.b16 %v714, %v714
    %v747 = vpack.c.b16 %v715, %v715
    %v748 = vpack.c.b16 %v716, %v716
    %v749 = vpack.c.b16 %v717, %v717
    %v750 = vpack.c.b16 %v718, %v718
    %v751 = vpack.c.b16 %v719, %v719
    %v752 = vpack.c.b16 %v720, %v720
    %v753 = vpack.c.b16 %v721, %v721
    %v754 = vpack.c.b16 %v722, %v722
    %v755 = vpack.c.b16 %v723, %v723
    %v756 = vpack.c.b16 %v724, %v724
    %v757 = vpack.c.b16 %v725, %v725
    %v758 = vpack.c.b16 %v726, %v726
    %v759 = vpack.c.b16 %v727, %v727
    %v760 = vpack.c.b16 %v728, %v728
    %v761 = vpack.c.b16 %v729, %v729
    %v762 = vpack.c.b16 %v730, %v730
    %v763 = vpack.c.b16 %v731, %v731
    %v764 = vpack.c.b16 %v732, %v732
    %v765 = vpack.c.b16 %v733, %v733
    %798 = vst [vmem:[%s3] sm:$0xf] %v734
    %799 = vst [vmem:[%s3 + $0x4] sm:$0xf] %v735
    %800 = vst [vmem:[%s3 + $0x8] sm:$0xf] %v736
    %801 = vst [vmem:[%s3 + $0xc] sm:$0xf] %v737
    %802 = vst [vmem:[%s3 + $0x10] sm:$0xf] %v738
    %803 = vst [vmem:[%s3 + $0x14] sm:$0xf] %v739
    %804 = vst [vmem:[%s3 + $0x18] sm:$0xf] %v740
    %805 = vst [vmem:[%s3 + $0x1c] sm:$0xf] %v741
    %806 = vst [vmem:[%s3 + $0x20] sm:$0xf] %v742
    %807 = vst [vmem:[%s3 + $0x24] sm:$0xf] %v743
    %808 = vst [vmem:[%s3 + $0x28] sm:$0xf] %v744
    %809 = vst [vmem:[%s3 + $0x2c] sm:$0xf] %v745
    %810 = vst [vmem:[%s3 + $0x30] sm:$0xf] %v746
    %811 = vst [vmem:[%s3 + $0x34] sm:$0xf] %v747
    %812 = vst [vmem:[%s3 + $0x38] sm:$0xf] %v748
    %813 = vst [vmem:[%s3 + $0x3c] sm:$0xf] %v749
    %814 = vst [vmem:[%s3 + $0x40] sm:$0xf] %v750
    %815 = vst [vmem:[%s3 + $0x44] sm:$0xf] %v751
    %816 = vst [vmem:[%s3 + $0x48] sm:$0xf] %v752
    %817 = vst [vmem:[%s3 + $0x4c] sm:$0xf] %v753
    %818 = vst [vmem:[%s3 + $0x50] sm:$0xf] %v754
    %819 = vst [vmem:[%s3 + $0x54] sm:$0xf] %v755
    %820 = vst [vmem:[%s3 + $0x58] sm:$0xf] %v756
    %821 = vst [vmem:[%s3 + $0x5c] sm:$0xf] %v757
    %822 = vst [vmem:[%s3 + $0x60] sm:$0xf] %v758
    %823 = vst [vmem:[%s3 + $0x64] sm:$0xf] %v759
    %824 = vst [vmem:[%s3 + $0x68] sm:$0xf] %v760
    %825 = vst [vmem:[%s3 + $0x6c] sm:$0xf] %v761
    %826 = vst [vmem:[%s3 + $0x70] sm:$0xf] %v762
    %827 = vst [vmem:[%s3 + $0x74] sm:$0xf] %v763
    %828 = vst [vmem:[%s3 + $0x78] sm:$0xf] %v764
    %829 = vst [vmem:[%s3 + $0x7c] sm:$0xf] %v765
    %v830 = vld [vmem:[%s2] sm:$0xff]
    %v831 = vld [vmem:[%s2 + $0x8] sm:$0xff]
    %v832 = vld [vmem:[%s2 + $0x10] sm:$0xff]
    %v833 = vld [vmem:[%s2 + $0x18] sm:$0xff]
    %v834 = vld [vmem:[%s2 + $0x20] sm:$0xff]
    %v835 = vld [vmem:[%s2 + $0x28] sm:$0xff]
    %v836 = vld [vmem:[%s2 + $0x30] sm:$0xff]
    %v837 = vld [vmem:[%s2 + $0x38] sm:$0xff]
    %v838 = vld [vmem:[%s2 + $0x40] sm:$0xff]
    %v839 = vld [vmem:[%s2 + $0x48] sm:$0xff]
    %v840 = vld [vmem:[%s2 + $0x50] sm:$0xff]
    %v841 = vld [vmem:[%s2 + $0x58] sm:$0xff]
    %v842 = vld [vmem:[%s2 + $0x60] sm:$0xff]
    %v843 = vld [vmem:[%s2 + $0x68] sm:$0xff]
    %v844 = vld [vmem:[%s2 + $0x70] sm:$0xff]
    %v845 = vld [vmem:[%s2 + $0x78] sm:$0xff]
    %v846 = vld [vmem:[%s2 + $0x80] sm:$0xff]
    %v847 = vld [vmem:[%s2 + $0x88] sm:$0xff]
    %v848 = vld [vmem:[%s2 + $0x90] sm:$0xff]
    %v849 = vld [vmem:[%s2 + $0x98] sm:$0xff]
    %v850 = vld [vmem:[%s2 + $0xa0] sm:$0xff]
    %v851 = vld [vmem:[%s2 + $0xa8] sm:$0xff]
    %v852 = vld [vmem:[%s2 + $0xb0] sm:$0xff]
    %v853 = vld [vmem:[%s2 + $0xb8] sm:$0xff]
    %v854 = vld [vmem:[%s2 + $0xc0] sm:$0xff]
    %v855 = vld [vmem:[%s2 + $0xc8] sm:$0xff]
    %v856 = vld [vmem:[%s2 + $0xd0] sm:$0xff]
    %v857 = vld [vmem:[%s2 + $0xd8] sm:$0xff]
    %v858 = vld [vmem:[%s2 + $0xe0] sm:$0xff]
    %v859 = vld [vmem:[%s2 + $0xe8] sm:$0xff]
    %v860 = vld [vmem:[%s2 + $0xf0] sm:$0xff]
    %v861 = vld [vmem:[%s2 + $0xf8] sm:$0xff]
    %v862 = vld [vmem:[#allocation2] sm:$0xff]
    %v863 = vld [vmem:[#allocation2 + $0x8] sm:$0xff]
    %v864 = vld [vmem:[#allocation2 + $0x10] sm:$0xff]
    %v865 = vld [vmem:[#allocation2 + $0x18] sm:$0xff]
    %v866 = vld [vmem:[#allocation2 + $0x20] sm:$0xff]
    %v867 = vld [vmem:[#allocation2 + $0x28] sm:$0xff]
    %v868 = vld [vmem:[#allocation2 + $0x30] sm:$0xff]
    %v869 = vld [vmem:[#allocation2 + $0x38] sm:$0xff]
    %v870 = vld [vmem:[#allocation2 + $0x40] sm:$0xff]
    %v871 = vld [vmem:[#allocation2 + $0x48] sm:$0xff]
    %v872 = vld [vmem:[#allocation2 + $0x50] sm:$0xff]
    %v873 = vld [vmem:[#allocation2 + $0x58] sm:$0xff]
    %v874 = vld [vmem:[#allocation2 + $0x60] sm:$0xff]
    %v875 = vld [vmem:[#allocation2 + $0x68] sm:$0xff]
    %v876 = vld [vmem:[#allocation2 + $0x70] sm:$0xff]
    %v877 = vld [vmem:[#allocation2 + $0x78] sm:$0xff]
    %v878 = vld [vmem:[#allocation2 + $0x80] sm:$0xff]
    %v879 = vld [vmem:[#allocation2 + $0x88] sm:$0xff]
    %v880 = vld [vmem:[#allocation2 + $0x90] sm:$0xff]
    %v881 = vld [vmem:[#allocation2 + $0x98] sm:$0xff]
    %v882 = vld [vmem:[#allocation2 + $0xa0] sm:$0xff]
    %v883 = vld [vmem:[#allocation2 + $0xa8] sm:$0xff]
    %v884 = vld [vmem:[#allocation2 + $0xb0] sm:$0xff]
    %v885 = vld [vmem:[#allocation2 + $0xb8] sm:$0xff]
    %v886 = vld [vmem:[#allocation2 + $0xc0] sm:$0xff]
    %v887 = vld [vmem:[#allocation2 + $0xc8] sm:$0xff]
    %v888 = vld [vmem:[#allocation2 + $0xd0] sm:$0xff]
    %v889 = vld [vmem:[#allocation2 + $0xd8] sm:$0xff]
    %v890 = vld [vmem:[#allocation2 + $0xe0] sm:$0xff]
    %v891 = vld [vmem:[#allocation2 + $0xe8] sm:$0xff]
    %v892 = vld [vmem:[#allocation2 + $0xf0] sm:$0xff]
    %v893 = vld [vmem:[#allocation2 + $0xf8] sm:$0xff]
    %v894 = vadd.f32 %v830, %v862
    %v895 = vadd.f32 %v831, %v863
    %v896 = vadd.f32 %v832, %v864
    %v897 = vadd.f32 %v833, %v865
    %v898 = vadd.f32 %v834, %v866
    %v899 = vadd.f32 %v835, %v867
    %v900 = vadd.f32 %v836, %v868
    %v901 = vadd.f32 %v837, %v869
    %v902 = vadd.f32 %v838, %v870
    %v903 = vadd.f32 %v839, %v871
    %v904 = vadd.f32 %v840, %v872
    %v905 = vadd.f32 %v841, %v873
    %v906 = vadd.f32 %v842, %v874
    %v907 = vadd.f32 %v843, %v875
    %v908 = vadd.f32 %v844, %v876
    %v909 = vadd.f32 %v845, %v877
    %v910 = vadd.f32 %v846, %v878
    %v911 = vadd.f32 %v847, %v879
    %v912 = vadd.f32 %v848, %v880
    %v913 = vadd.f32 %v849, %v881
    %v914 = vadd.f32 %v850, %v882
    %v915 = vadd.f32 %v851, %v883
    %v916 = vadd.f32 %v852, %v884
    %v917 = vadd.f32 %v853, %v885
    %v918 = vadd.f32 %v854, %v886
    %v919 = vadd.f32 %v855, %v887
    %v920 = vadd.f32 %v856, %v888
    %v921 = vadd.f32 %v857, %v889
    %v922 = vadd.f32 %v858, %v890
    %v923 = vadd.f32 %v859, %v891
    %v924 = vadd.f32 %v860, %v892
    %v925 = vadd.f32 %v861, %v893
    %926 = vst [vmem:[%s4] sm:$0xff] %v894
    %927 = vst [vmem:[%s4 + $0x8] sm:$0xff] %v895
    %928 = vst [vmem:[%s4 + $0x10] sm:$0xff] %v896
    %929 = vst [vmem:[%s4 + $0x18] sm:$0xff] %v897
    %930 = vst [vmem:[%s4 + $0x20] sm:$0xff] %v898
    %931 = vst [vmem:[%s4 + $0x28] sm:$0xff] %v899
    %932 = vst [vmem:[%s4 + $0x30] sm:$0xff] %v900
    %933 = vst [vmem:[%s4 + $0x38] sm:$0xff] %v901
    %934 = vst [vmem:[%s4 + $0x40] sm:$0xff] %v902
    %935 = vst [vmem:[%s4 + $0x48] sm:$0xff] %v903
    %936 = vst [vmem:[%s4 + $0x50] sm:$0xff] %v904
    %937 = vst [vmem:[%s4 + $0x58] sm:$0xff] %v905
    %938 = vst [vmem:[%s4 + $0x60] sm:$0xff] %v906
    %939 = vst [vmem:[%s4 + $0x68] sm:$0xff] %v907
    %940 = vst [vmem:[%s4 + $0x70] sm:$0xff] %v908
    %941 = vst [vmem:[%s4 + $0x78] sm:$0xff] %v909
    %942 = vst [vmem:[%s4 + $0x80] sm:$0xff] %v910
    %943 = vst [vmem:[%s4 + $0x88] sm:$0xff] %v911
    %944 = vst [vmem:[%s4 + $0x90] sm:$0xff] %v912
    %945 = vst [vmem:[%s4 + $0x98] sm:$0xff] %v913
    %946 = vst [vmem:[%s4 + $0xa0] sm:$0xff] %v914
    %947 = vst [vmem:[%s4 + $0xa8] sm:$0xff] %v915
    %948 = vst [vmem:[%s4 + $0xb0] sm:$0xff] %v916
    %949 = vst [vmem:[%s4 + $0xb8] sm:$0xff] %v917
    %950 = vst [vmem:[%s4 + $0xc0] sm:$0xff] %v918
    %951 = vst [vmem:[%s4 + $0xc8] sm:$0xff] %v919
    %952 = vst [vmem:[%s4 + $0xd0] sm:$0xff] %v920
    %953 = vst [vmem:[%s4 + $0xd8] sm:$0xff] %v921
    %954 = vst [vmem:[%s4 + $0xe0] sm:$0xff] %v922
    %955 = vst [vmem:[%s4 + $0xe8] sm:$0xff] %v923
    %956 = vst [vmem:[%s4 + $0xf0] sm:$0xff] %v924
    %957 = vst [vmem:[%s4 + $0xf8] sm:$0xff] %v925
  $region21: #{recsys_gnn_forward.3} parent=0 // pred_fallthru
    _
  // Predicated region
  $region22: #{recsys_gnn_forward.3} parent=0 // pred_check
    _
  $region23: #{recsys_gnn_forward.3} parent=0 // pred_check_branch
    %959 = sbr.rel (0) target = $region25
  $region24: #{recsys_gnn_forward.3} parent=0 // pred_region
    _
  $region25: #{recsys_gnn_forward.3} parent=0 // pred_fallthru
    _
  // Predicated region
  $region26: #{recsys_gnn_forward.3} parent=0 // pred_check
    _
  $region27: #{recsys_gnn_forward.3} parent=0 // pred_check_branch
    %961 = sbr.rel (0) target = $region29
  $region28: #{recsys_gnn_forward.3} parent=0 // pred_region
    _
  $region29: #{recsys_gnn_forward.3} parent=0 // pred_fallthru
    _
  // Predicated region
  $region30: #{recsys_gnn_forward.3} parent=0 // pred_check
    _
  $region31: #{recsys_gnn_forward.3} parent=0 // pred_check_branch
    %963 = sbr.rel (0) target = $region33
  $region32: #{recsys_gnn_forward.3} parent=0 // pred_region
    _
  $region33: #{recsys_gnn_forward.3} parent=0 // pred_fallthru
    _
  // Predicated region
  $region34: #{recsys_gnn_forward.3} parent=0 // pred_check
    _
  $region35: #{recsys_gnn_forward.3} parent=0 // pred_check_branch
    %965 = sbr.rel (0) target = $region37
  $region36: #{recsys_gnn_forward.3} parent=0 // pred_region
    _
  $region37: #{recsys_gnn_forward.3} parent=0 // pred_fallthru
    _

// kernel: recsys_gnn_forward.5
$region0: #{recsys_gnn_forward.5}
  #allocation0 [shape = 'u32[]', space=smem, size = 0x4, offset = 0x4, fixed_abs, tag = 'smem constant byte address 0x4 - core index']
  #allocation1 [shape = 'u32[144,128]{1,0:T(1,128)}', space=vmem, size = 0x12000, scoped, tag = 'internal scratch']
  #allocation2 [shape = 'f32[256,128]{1,0:T(8,128)}', space=vmem, size = 0x20000, scoped, tag = 'scratch operand']
  %s0 = inlined_call_operand.vmem [shape: bf16[256,256], index: 0, kind: input, shape index: {}]
  %s1 = inlined_call_operand.vmem [shape: bf16[256,128], index: 1, kind: input, shape index: {}]
  %s2 = inlined_call_operand.vmem [shape: f32[256,128], index: 2, kind: input, shape index: {}, may-alias: {2,4}]
  %s3 = inlined_call_operand.hbm [shape: bf16[256,128], index: 3, kind: output, shape index: {0}]
  %s4 = inlined_call_operand.vmem [shape: f32[256,128], index: 4, kind: output, shape index: {1}, may-alias: {2,4}]
  %5 = xla_tuple %s3, %s4
  %s6 = sld [smem:[#allocation0]]
  $region38: #{recsys_gnn_forward.5} parent=0
    _
  %s8 = ssub.s32 1, %s6
  %s9 = scalar_select 0, %s8, %s6
  $region1: #{recsys_gnn_forward.5} parent=0
    #allocation3 [shape = 'u8[65536]{0}', space=vmem, size = 0x10000, scoped, tag = 'output window, operand 0, single buffered']
    #allocation4 [shape = 's32[1]{0}', space=sflag, size = 0x4, scoped, tag = 'scoped memory for recsys_gnn_forward.5']
    %10 = vsyncpa [#allocation4], 0
    // Predicated region
    $region2: #{recsys_gnn_forward.5} parent=1 // pred_check
      _
    $region3: #{recsys_gnn_forward.5} parent=1 // pred_check_branch
      %12 = sbr.rel (0) target = $region5
    $region4: #{recsys_gnn_forward.5} parent=1 // pred_region
      _
    $region5: #{recsys_gnn_forward.5} parent=1 // pred_fallthru
      _
    // Predicated region
    $region6: #{recsys_gnn_forward.5} parent=1 // pred_check
      _
    $region7: #{recsys_gnn_forward.5} parent=1 // pred_check_branch
      %14 = sbr.rel (0) target = $region9
    $region8: #{recsys_gnn_forward.5} parent=1 // pred_region
      _
    $region9: #{recsys_gnn_forward.5} parent=1 // pred_fallthru
      _
    // Predicated region
    $region10: #{recsys_gnn_forward.5} parent=1 // pred_check
      _
    $region11: #{recsys_gnn_forward.5} parent=1 // pred_check_branch
      %16 = sbr.rel (0) target = $region13
    $region12: #{recsys_gnn_forward.5} parent=1 // pred_region
      _
    $region13: #{recsys_gnn_forward.5} parent=1 // pred_fallthru
      _
    %p18 = scmp.eq.s32.totalorder 0, 0
    // Predicated region
    $region14: #{recsys_gnn_forward.5} parent=1 // pred_check
      %p19 = pneg %p18
    $region15: #{recsys_gnn_forward.5} parent=1 // pred_check_branch
      %21 = sbr.rel (%p19) target = $region17
    $region16: #{recsys_gnn_forward.5} parent=1 // pred_region
      %22 = vst [vmem:[#allocation2] sm:$0xff] 0.0
      %23 = vst [vmem:[#allocation2 + $0x8] sm:$0xff] 0.0
      %24 = vst [vmem:[#allocation2 + $0x10] sm:$0xff] 0.0
      %25 = vst [vmem:[#allocation2 + $0x18] sm:$0xff] 0.0
      %26 = vst [vmem:[#allocation2 + $0x20] sm:$0xff] 0.0
      %27 = vst [vmem:[#allocation2 + $0x28] sm:$0xff] 0.0
      %28 = vst [vmem:[#allocation2 + $0x30] sm:$0xff] 0.0
      %29 = vst [vmem:[#allocation2 + $0x38] sm:$0xff] 0.0
      %30 = vst [vmem:[#allocation2 + $0x40] sm:$0xff] 0.0
      %31 = vst [vmem:[#allocation2 + $0x48] sm:$0xff] 0.0
      %32 = vst [vmem:[#allocation2 + $0x50] sm:$0xff] 0.0
      %33 = vst [vmem:[#allocation2 + $0x58] sm:$0xff] 0.0
      %34 = vst [vmem:[#allocation2 + $0x60] sm:$0xff] 0.0
      %35 = vst [vmem:[#allocation2 + $0x68] sm:$0xff] 0.0
      %36 = vst [vmem:[#allocation2 + $0x70] sm:$0xff] 0.0
      %37 = vst [vmem:[#allocation2 + $0x78] sm:$0xff] 0.0
      %38 = vst [vmem:[#allocation2 + $0x80] sm:$0xff] 0.0
      %39 = vst [vmem:[#allocation2 + $0x88] sm:$0xff] 0.0
      %40 = vst [vmem:[#allocation2 + $0x90] sm:$0xff] 0.0
      %41 = vst [vmem:[#allocation2 + $0x98] sm:$0xff] 0.0
      %42 = vst [vmem:[#allocation2 + $0xa0] sm:$0xff] 0.0
      %43 = vst [vmem:[#allocation2 + $0xa8] sm:$0xff] 0.0
      %44 = vst [vmem:[#allocation2 + $0xb0] sm:$0xff] 0.0
      %45 = vst [vmem:[#allocation2 + $0xb8] sm:$0xff] 0.0
      %46 = vst [vmem:[#allocation2 + $0xc0] sm:$0xff] 0.0
      %47 = vst [vmem:[#allocation2 + $0xc8] sm:$0xff] 0.0
      %48 = vst [vmem:[#allocation2 + $0xd0] sm:$0xff] 0.0
      %49 = vst [vmem:[#allocation2 + $0xd8] sm:$0xff] 0.0
      %50 = vst [vmem:[#allocation2 + $0xe0] sm:$0xff] 0.0
      %51 = vst [vmem:[#allocation2 + $0xe8] sm:$0xff] 0.0
      %52 = vst [vmem:[#allocation2 + $0xf0] sm:$0xff] 0.0
      %53 = vst [vmem:[#allocation2 + $0xf8] sm:$0xff] 0.0
    $region17: #{recsys_gnn_forward.5} parent=1 // pred_fallthru
      _
    %s54 = smul.u32 0, 256
    %s55 = sshra.s32 %s54, 3
    %s56 = sand.u32 %s54, 7
    %s57 = smul.addr %s55, 4
    %s58 = scalar_lea.vmem %s1, %s57
    %v59 = vld [vmem:[%s58] sm:$0xf]
    %v60 = vld [vmem:[%s58 + $0x4] sm:$0xf]
    %v61 = vld [vmem:[%s58 + $0x8] sm:$0xf]
    %v62 = vld [vmem:[%s58 + $0xc] sm:$0xf]
    %v63 = vld [vmem:[%s58 + $0x10] sm:$0xf]
    %v64 = vld [vmem:[%s58 + $0x14] sm:$0xf]
    %v65 = vld [vmem:[%s58 + $0x18] sm:$0xf]
    %v66 = vld [vmem:[%s58 + $0x1c] sm:$0xf]
    %v67 = vld [vmem:[%s58 + $0x20] sm:$0xf]
    %v68 = vld [vmem:[%s58 + $0x24] sm:$0xf]
    %v69 = vld [vmem:[%s58 + $0x28] sm:$0xf]
    %v70 = vld [vmem:[%s58 + $0x2c] sm:$0xf]
    %v71 = vld [vmem:[%s58 + $0x30] sm:$0xf]
    %v72 = vld [vmem:[%s58 + $0x34] sm:$0xf]
    %v73 = vld [vmem:[%s58 + $0x38] sm:$0xf]
    %v74 = vld [vmem:[%s58 + $0x3c] sm:$0xf]
    %v75 = vld [vmem:[%s58 + $0x40] sm:$0xf]
    %v76 = vld [vmem:[%s58 + $0x44] sm:$0xf]
    %v77 = vld [vmem:[%s58 + $0x48] sm:$0xf]
    %v78 = vld [vmem:[%s58 + $0x4c] sm:$0xf]
    %v79 = vld [vmem:[%s58 + $0x50] sm:$0xf]
    %v80 = vld [vmem:[%s58 + $0x54] sm:$0xf]
    %v81 = vld [vmem:[%s58 + $0x58] sm:$0xf]
    %v82 = vld [vmem:[%s58 + $0x5c] sm:$0xf]
    %v83 = vld [vmem:[%s58 + $0x60] sm:$0xf]
    %v84 = vld [vmem:[%s58 + $0x64] sm:$0xf]
    %v85 = vld [vmem:[%s58 + $0x68] sm:$0xf]
    %v86 = vld [vmem:[%s58 + $0x6c] sm:$0xf]
    %v87 = vld [vmem:[%s58 + $0x70] sm:$0xf]
    %v88 = vld [vmem:[%s58 + $0x74] sm:$0xf]
    %v89 = vld [vmem:[%s58 + $0x78] sm:$0xf]
    %v90 = vld [vmem:[%s58 + $0x7c] sm:$0xf]
    %v91 = vld [vmem:[#allocation2] sm:$0xff]
    %v92 = vld [vmem:[#allocation2 + $0x8] sm:$0xff]
    %v93 = vld [vmem:[#allocation2 + $0x10] sm:$0xff]
    %v94 = vld [vmem:[#allocation2 + $0x18] sm:$0xff]
    %v95 = vld [vmem:[#allocation2 + $0x20] sm:$0xff]
    %v96 = vld [vmem:[#allocation2 + $0x28] sm:$0xff]
    %v97 = vld [vmem:[#allocation2 + $0x30] sm:$0xff]
    %v98 = vld [vmem:[#allocation2 + $0x38] sm:$0xff]
    %v99 = vld [vmem:[#allocation2 + $0x40] sm:$0xff]
    %v100 = vld [vmem:[#allocation2 + $0x48] sm:$0xff]
    %v101 = vld [vmem:[#allocation2 + $0x50] sm:$0xff]
    %v102 = vld [vmem:[#allocation2 + $0x58] sm:$0xff]
    %v103 = vld [vmem:[#allocation2 + $0x60] sm:$0xff]
    %v104 = vld [vmem:[#allocation2 + $0x68] sm:$0xff]
    %v105 = vld [vmem:[#allocation2 + $0x70] sm:$0xff]
    %v106 = vld [vmem:[#allocation2 + $0x78] sm:$0xff]
    %v107 = vld [vmem:[#allocation2 + $0x80] sm:$0xff]
    %v108 = vld [vmem:[#allocation2 + $0x88] sm:$0xff]
    %v109 = vld [vmem:[#allocation2 + $0x90] sm:$0xff]
    %v110 = vld [vmem:[#allocation2 + $0x98] sm:$0xff]
    %v111 = vld [vmem:[#allocation2 + $0xa0] sm:$0xff]
    %v112 = vld [vmem:[#allocation2 + $0xa8] sm:$0xff]
    %v113 = vld [vmem:[#allocation2 + $0xb0] sm:$0xff]
    %v114 = vld [vmem:[#allocation2 + $0xb8] sm:$0xff]
    %v115 = vld [vmem:[#allocation2 + $0xc0] sm:$0xff]
    %v116 = vld [vmem:[#allocation2 + $0xc8] sm:$0xff]
    %v117 = vld [vmem:[#allocation2 + $0xd0] sm:$0xff]
    %v118 = vld [vmem:[#allocation2 + $0xd8] sm:$0xff]
    %v119 = vld [vmem:[#allocation2 + $0xe0] sm:$0xff]
    %v120 = vld [vmem:[#allocation2 + $0xe8] sm:$0xff]
    %v121 = vld [vmem:[#allocation2 + $0xf0] sm:$0xff]
    %v122 = vld [vmem:[#allocation2 + $0xf8] sm:$0xff]
    %v123 = vld [vmem:[%s0] sm:$0xff]
    %v124 = vld [vmem:[%s0 + $0x8] sm:$0xff]
    %v125 = vld [vmem:[%s0 + $0x10] sm:$0xff]
    %v126 = vld [vmem:[%s0 + $0x18] sm:$0xff]
    %v127 = vld [vmem:[%s0 + $0x20] sm:$0xff]
    %v128 = vld [vmem:[%s0 + $0x28] sm:$0xff]
    %v129 = vld [vmem:[%s0 + $0x30] sm:$0xff]
    %v130 = vld [vmem:[%s0 + $0x38] sm:$0xff]
    %v131 = vld [vmem:[%s0 + $0x40] sm:$0xff]
    %v132 = vld [vmem:[%s0 + $0x48] sm:$0xff]
    %v133 = vld [vmem:[%s0 + $0x50] sm:$0xff]
    %v134 = vld [vmem:[%s0 + $0x58] sm:$0xff]
    %v135 = vld [vmem:[%s0 + $0x60] sm:$0xff]
    %v136 = vld [vmem:[%s0 + $0x68] sm:$0xff]
    %v137 = vld [vmem:[%s0 + $0x70] sm:$0xff]
    %v138 = vld [vmem:[%s0 + $0x78] sm:$0xff]
    %v139 = vld [vmem:[%s0 + $0x80] sm:$0xff]
    %v140 = vld [vmem:[%s0 + $0x88] sm:$0xff]
    %v141 = vld [vmem:[%s0 + $0x90] sm:$0xff]
    %v142 = vld [vmem:[%s0 + $0x98] sm:$0xff]
    %v143 = vld [vmem:[%s0 + $0xa0] sm:$0xff]
    %v144 = vld [vmem:[%s0 + $0xa8] sm:$0xff]
    %v145 = vld [vmem:[%s0 + $0xb0] sm:$0xff]
    %v146 = vld [vmem:[%s0 + $0xb8] sm:$0xff]
    %v147 = vld [vmem:[%s0 + $0xc0] sm:$0xff]
    %v148 = vld [vmem:[%s0 + $0xc8] sm:$0xff]
    %v149 = vld [vmem:[%s0 + $0xd0] sm:$0xff]
    %v150 = vld [vmem:[%s0 + $0xd8] sm:$0xff]
    %v151 = vld [vmem:[%s0 + $0xe0] sm:$0xff]
    %v152 = vld [vmem:[%s0 + $0xe8] sm:$0xff]
    %v153 = vld [vmem:[%s0 + $0xf0] sm:$0xff]
    %v154 = vld [vmem:[%s0 + $0xf8] sm:$0xff]
    %v187 = vunpack.c.l.b16 %v123
    %v188 = vunpack.c.h.b16 %v123
    %v189 = vunpack.c.l.b16 %v124
    %v190 = vunpack.c.h.b16 %v124
    %v191 = vunpack.c.l.b16 %v125
    %v192 = vunpack.c.h.b16 %v125
    %v193 = vunpack.c.l.b16 %v126
    %v194 = vunpack.c.h.b16 %v126
    %v195 = vunpack.c.l.b16 %v127
    %v196 = vunpack.c.h.b16 %v127
    %v197 = vunpack.c.l.b16 %v128
    %v198 = vunpack.c.h.b16 %v128
    %v199 = vunpack.c.l.b16 %v129
    %v200 = vunpack.c.h.b16 %v129
    %v201 = vunpack.c.l.b16 %v130
    %v202 = vunpack.c.h.b16 %v130
    %v203 = vunpack.c.l.b16 %v131
    %v204 = vunpack.c.h.b16 %v131
    %v205 = vunpack.c.l.b16 %v132
    %v206 = vunpack.c.h.b16 %v132
    %v207 = vunpack.c.l.b16 %v133
    %v208 = vunpack.c.h.b16 %v133
    %v209 = vunpack.c.l.b16 %v134
    %v210 = vunpack.c.h.b16 %v134
    %v211 = vunpack.c.l.b16 %v135
    %v212 = vunpack.c.h.b16 %v135
    %v213 = vunpack.c.l.b16 %v136
    %v214 = vunpack.c.h.b16 %v136
    %v215 = vunpack.c.l.b16 %v137
    %v216 = vunpack.c.h.b16 %v137
    %v217 = vunpack.c.l.b16 %v138
    %v218 = vunpack.c.h.b16 %v138
    %v219 = vunpack.c.l.b16 %v139
    %v220 = vunpack.c.h.b16 %v139
    %v221 = vunpack.c.l.b16 %v140
    %v222 = vunpack.c.h.b16 %v140
    %v223 = vunpack.c.l.b16 %v141
    %v224 = vunpack.c.h.b16 %v141
    %v225 = vunpack.c.l.b16 %v142
    %v226 = vunpack.c.h.b16 %v142
    %v227 = vunpack.c.l.b16 %v143
    %v228 = vunpack.c.h.b16 %v143
    %v229 = vunpack.c.l.b16 %v144
    %v230 = vunpack.c.h.b16 %v144
    %v231 = vunpack.c.l.b16 %v145
    %v232 = vunpack.c.h.b16 %v145
    %v233 = vunpack.c.l.b16 %v146
    %v234 = vunpack.c.h.b16 %v146
    %v235 = vunpack.c.l.b16 %v147
    %v236 = vunpack.c.h.b16 %v147
    %v237 = vunpack.c.l.b16 %v148
    %v238 = vunpack.c.h.b16 %v148
    %v239 = vunpack.c.l.b16 %v149
    %v240 = vunpack.c.h.b16 %v149
    %v241 = vunpack.c.l.b16 %v150
    %v242 = vunpack.c.h.b16 %v150
    %v243 = vunpack.c.l.b16 %v151
    %v244 = vunpack.c.h.b16 %v151
    %v245 = vunpack.c.l.b16 %v152
    %v246 = vunpack.c.h.b16 %v152
    %v247 = vunpack.c.l.b16 %v153
    %v248 = vunpack.c.h.b16 %v153
    %v249 = vunpack.c.l.b16 %v154
    %v250 = vunpack.c.h.b16 %v154
    %v251 = vpack.c.b16 %v189, %v187
    %v252 = vpack.c.b16 %v190, %v188
    %v253 = vpack.c.b16 %v193, %v191
    %v254 = vpack.c.b16 %v194, %v192
    %v255 = vpack.c.b16 %v197, %v195
    %v256 = vpack.c.b16 %v198, %v196
    %v257 = vpack.c.b16 %v201, %v199
    %v258 = vpack.c.b16 %v202, %v200
    %v259 = vpack.c.b16 %v205, %v203
    %v260 = vpack.c.b16 %v206, %v204
    %v261 = vpack.c.b16 %v209, %v207
    %v262 = vpack.c.b16 %v210, %v208
    %v263 = vpack.c.b16 %v213, %v211
    %v264 = vpack.c.b16 %v214, %v212
    %v265 = vpack.c.b16 %v217, %v215
    %v266 = vpack.c.b16 %v218, %v216
    %v267 = vpack.c.b16 %v221, %v219
    %v268 = vpack.c.b16 %v222, %v220
    %v269 = vpack.c.b16 %v225, %v223
    %v270 = vpack.c.b16 %v226, %v224
    %v271 = vpack.c.b16 %v229, %v227
    %v272 = vpack.c.b16 %v230, %v228
    %v273 = vpack.c.b16 %v233, %v231
    %v274 = vpack.c.b16 %v234, %v232
    %v275 = vpack.c.b16 %v237, %v235
    %v276 = vpack.c.b16 %v238, %v236
    %v277 = vpack.c.b16 %v241, %v239
    %v278 = vpack.c.b16 %v242, %v240
    %v279 = vpack.c.b16 %v245, %v243
    %v280 = vpack.c.b16 %v246, %v244
    %v281 = vpack.c.b16 %v249, %v247
    %v282 = vpack.c.b16 %v250, %v248
    %v347 = vunpack.c.l.b16 %v59
    %v348 = vunpack.c.l.b16 %v60
    %v349 = vunpack.c.l.b16 %v61
    %v350 = vunpack.c.l.b16 %v62
    %v351 = vunpack.c.l.b16 %v63
    %v352 = vunpack.c.l.b16 %v64
    %v353 = vunpack.c.l.b16 %v65
    %v354 = vunpack.c.l.b16 %v66
    %v355 = vunpack.c.l.b16 %v67
    %v356 = vunpack.c.l.b16 %v68
    %v357 = vunpack.c.l.b16 %v69
    %v358 = vunpack.c.l.b16 %v70
    %v359 = vunpack.c.l.b16 %v71
    %v360 = vunpack.c.l.b16 %v72
    %v361 = vunpack.c.l.b16 %v73
    %v362 = vunpack.c.l.b16 %v74
    %v363 = vunpack.c.l.b16 %v75
    %v364 = vunpack.c.l.b16 %v76
    %v365 = vunpack.c.l.b16 %v77
    %v366 = vunpack.c.l.b16 %v78
    %v367 = vunpack.c.l.b16 %v79
    %v368 = vunpack.c.l.b16 %v80
    %v369 = vunpack.c.l.b16 %v81
    %v370 = vunpack.c.l.b16 %v82
    %v371 = vunpack.c.l.b16 %v83
    %v372 = vunpack.c.l.b16 %v84
    %v373 = vunpack.c.l.b16 %v85
    %v374 = vunpack.c.l.b16 %v86
    %v375 = vunpack.c.l.b16 %v87
    %v376 = vunpack.c.l.b16 %v88
    %v377 = vunpack.c.l.b16 %v89
    %v378 = vunpack.c.l.b16 %v90
    %v379 = vpack.c.b16 %v348, %v347
    %v380 = vpack.c.b16 %v350, %v349
    %v381 = vpack.c.b16 %v352, %v351
    %v382 = vpack.c.b16 %v354, %v353
    %v383 = vpack.c.b16 %v356, %v355
    %v384 = vpack.c.b16 %v358, %v357
    %v385 = vpack.c.b16 %v360, %v359
    %v386 = vpack.c.b16 %v362, %v361
    %v387 = vpack.c.b16 %v364, %v363
    %v388 = vpack.c.b16 %v366, %v365
    %v389 = vpack.c.b16 %v368, %v367
    %v390 = vpack.c.b16 %v370, %v369
    %v391 = vpack.c.b16 %v372, %v371
    %v392 = vpack.c.b16 %v374, %v373
    %v393 = vpack.c.b16 %v376, %v375
    %v394 = vpack.c.b16 %v378, %v377
    %411 = vmatprep.subr.bf16.mxu0 0
    %412 = vmatpush1.bf16.msra.mxu0 %v379
    %413 = vmatprep.subr.bf16.mxu0 0
    %414 = vmatpush1.bf16.msra.mxu0 %v380
    %415 = vmatprep.subr.bf16.mxu0 0
    %416 = vmatpush1.bf16.msra.mxu0 %v381
    %417 = vmatprep.subr.bf16.mxu0 0
    %418 = vmatpush1.bf16.msra.mxu0 %v382
    %419 = vmatprep.subr.bf16.mxu0 0
    %420 = vmatpush1.bf16.msra.mxu0 %v383
    %421 = vmatprep.subr.bf16.mxu0 0
    %422 = vmatpush1.bf16.msra.mxu0 %v384
    %423 = vmatprep.subr.bf16.mxu0 0
    %424 = vmatpush1.bf16.msra.mxu0 %v385
    %425 = vmatprep.subr.bf16.mxu0 0
    %426 = vmatpush1.bf16.msra.mxu0 %v386
    %427 = vmatprep.subr.bf16.mxu0 0
    %428 = vmatpush1.bf16.msra.mxu0 %v387
    %429 = vmatprep.subr.bf16.mxu0 0
    %430 = vmatpush1.bf16.msra.mxu0 %v388
    %431 = vmatprep.subr.bf16.mxu0 0
    %432 = vmatpush1.bf16.msra.mxu0 %v389
    %433 = vmatprep.subr.bf16.mxu0 0
    %434 = vmatpush1.bf16.msra.mxu0 %v390
    %435 = vmatprep.subr.bf16.mxu0 0
    %436 = vmatpush1.bf16.msra.mxu0 %v391
    %437 = vmatprep.subr.bf16.mxu0 0
    %438 = vmatpush1.bf16.msra.mxu0 %v392
    %439 = vmatprep.subr.bf16.mxu0 0
    %440 = vmatpush1.bf16.msra.mxu0 %v393
    %441 = vmatprep.subr.bf16.mxu0 0
    %442 = vmatpush1.bf16.msra.mxu0 %v394
    %443 = vmatprep.mubr.bf16.mxu0 %v252
    %444 = vmatmul.mubr.bf16.gmra.mrb[0].mxu0 %v251
    %v445 = vpop.f32.mrb[0].mxu0
    %v446 = vadd.f32 0.0, %v445
    %v447 = vpop.f32.mrb[0].mxu0
    %v448 = vpop.f32.mrb[0].mxu0
    %v449 = vadd.f32 0.0, %v448
    %v450 = vpop.f32.mrb[0].mxu0
    %451 = vmatprep.mubr.bf16.mxu0 %v254
    %452 = vmatmul.mubr.bf16.gmra.mrb[0].mxu0 %v253
    %v453 = vpop.f32.mrb[0].mxu0
    %v454 = vadd.f32 0.0, %v453
    %v455 = vpop.f32.mrb[0].mxu0
    %v456 = vpop.f32.mrb[0].mxu0
    %v457 = vadd.f32 0.0, %v456
    %v458 = vpop.f32.mrb[0].mxu0
    %459 = vmatprep.mubr.bf16.mxu0 %v256
    %460 = vmatmul.mubr.bf16.gmra.mrb[0].mxu0 %v255
    %v461 = vpop.f32.mrb[0].mxu0
    %v462 = vadd.f32 0.0, %v461
    %v463 = vpop.f32.mrb[0].mxu0
    %v464 = vpop.f32.mrb[0].mxu0
    %v465 = vadd.f32 0.0, %v464
    %v466 = vpop.f32.mrb[0].mxu0
    %467 = vmatprep.mubr.bf16.mxu0 %v258
    %468 = vmatmul.mubr.bf16.gmra.mrb[0].mxu0 %v257
    %v469 = vpop.f32.mrb[0].mxu0
    %v470 = vadd.f32 0.0, %v469
    %v471 = vpop.f32.mrb[0].mxu0
    %v472 = vpop.f32.mrb[0].mxu0
    %v473 = vadd.f32 0.0, %v472
    %v474 = vpop.f32.mrb[0].mxu0
    %475 = vmatprep.mubr.bf16.mxu0 %v260
    %476 = vmatmul.mubr.bf16.gmra.mrb[0].mxu0 %v259
    %v477 = vpop.f32.mrb[0].mxu0
    %v478 = vadd.f32 0.0, %v477
    %v479 = vpop.f32.mrb[0].mxu0
    %v480 = vpop.f32.mrb[0].mxu0
    %v481 = vadd.f32 0.0, %v480
    %v482 = vpop.f32.mrb[0].mxu0
    %483 = vmatprep.mubr.bf16.mxu0 %v262
    %484 = vmatmul.mubr.bf16.gmra.mrb[0].mxu0 %v261
    %v485 = vpop.f32.mrb[0].mxu0
    %v486 = vadd.f32 0.0, %v485
    %v487 = vpop.f32.mrb[0].mxu0
    %v488 = vpop.f32.mrb[0].mxu0
    %v489 = vadd.f32 0.0, %v488
    %v490 = vpop.f32.mrb[0].mxu0
    %491 = vmatprep.mubr.bf16.mxu0 %v264
    %492 = vmatmul.mubr.bf16.gmra.mrb[0].mxu0 %v263
    %v493 = vpop.f32.mrb[0].mxu0
    %v494 = vadd.f32 0.0, %v493
    %v495 = vpop.f32.mrb[0].mxu0
    %v496 = vpop.f32.mrb[0].mxu0
    %v497 = vadd.f32 0.0, %v496
    %v498 = vpop.f32.mrb[0].mxu0
    %499 = vmatprep.mubr.bf16.mxu0 %v266
    %500 = vmatmul.mubr.bf16.gmra.mrb[0].mxu0 %v265
    %v501 = vpop.f32.mrb[0].mxu0
    %v502 = vadd.f32 0.0, %v501
    %v503 = vpop.f32.mrb[0].mxu0
    %v504 = vpop.f32.mrb[0].mxu0
    %v505 = vadd.f32 0.0, %v504
    %v506 = vpop.f32.mrb[0].mxu0
    %507 = vmatprep.mubr.bf16.mxu0 %v268
    %508 = vmatmul.mubr.bf16.gmra.mrb[0].mxu0 %v267
    %v509 = vpop.f32.mrb[0].mxu0
    %v510 = vadd.f32 0.0, %v509
    %v511 = vpop.f32.mrb[0].mxu0
    %v512 = vpop.f32.mrb[0].mxu0
    %v513 = vadd.f32 0.0, %v512
    %v514 = vpop.f32.mrb[0].mxu0
    %515 = vmatprep.mubr.bf16.mxu0 %v270
    %516 = vmatmul.mubr.bf16.gmra.mrb[0].mxu0 %v269
    %v517 = vpop.f32.mrb[0].mxu0
    %v518 = vadd.f32 0.0, %v517
    %v519 = vpop.f32.mrb[0].mxu0
    %v520 = vpop.f32.mrb[0].mxu0
    %v521 = vadd.f32 0.0, %v520
    %v522 = vpop.f32.mrb[0].mxu0
    %523 = vmatprep.mubr.bf16.mxu0 %v272
    %524 = vmatmul.mubr.bf16.gmra.mrb[0].mxu0 %v271
    %v525 = vpop.f32.mrb[0].mxu0
    %v526 = vadd.f32 0.0, %v525
    %v527 = vpop.f32.mrb[0].mxu0
    %v528 = vpop.f32.mrb[0].mxu0
    %v529 = vadd.f32 0.0, %v528
    %v530 = vpop.f32.mrb[0].mxu0
    %531 = vmatprep.mubr.bf16.mxu0 %v274
    %532 = vmatmul.mubr.bf16.gmra.mrb[0].mxu0 %v273
    %v533 = vpop.f32.mrb[0].mxu0
    %v534 = vadd.f32 0.0, %v533
    %v535 = vpop.f32.mrb[0].mxu0
    %v536 = vpop.f32.mrb[0].mxu0
    %v537 = vadd.f32 0.0, %v536
    %v538 = vpop.f32.mrb[0].mxu0
    %539 = vmatprep.mubr.bf16.mxu0 %v276
    %540 = vmatmul.mubr.bf16.gmra.mrb[0].mxu0 %v275
    %v541 = vpop.f32.mrb[0].mxu0
    %v542 = vadd.f32 0.0, %v541
    %v543 = vpop.f32.mrb[0].mxu0
    %v544 = vpop.f32.mrb[0].mxu0
    %v545 = vadd.f32 0.0, %v544
    %v546 = vpop.f32.mrb[0].mxu0
    %547 = vmatprep.mubr.bf16.mxu0 %v278
    %548 = vmatmul.mubr.bf16.gmra.mrb[0].mxu0 %v277
    %v549 = vpop.f32.mrb[0].mxu0
    %v550 = vadd.f32 0.0, %v549
    %v551 = vpop.f32.mrb[0].mxu0
    %v552 = vpop.f32.mrb[0].mxu0
    %v553 = vadd.f32 0.0, %v552
    %v554 = vpop.f32.mrb[0].mxu0
    %555 = vmatprep.mubr.bf16.mxu0 %v280
    %556 = vmatmul.mubr.bf16.gmra.mrb[0].mxu0 %v279
    %v557 = vpop.f32.mrb[0].mxu0
    %v558 = vadd.f32 0.0, %v557
    %v559 = vpop.f32.mrb[0].mxu0
    %v560 = vpop.f32.mrb[0].mxu0
    %v561 = vadd.f32 0.0, %v560
    %v562 = vpop.f32.mrb[0].mxu0
    %563 = vmatprep.mubr.bf16.mxu0 %v282
    %564 = vmatmul.mubr.bf16.gmra.mrb[0].mxu0 %v281
    %v565 = vpop.f32.mrb[0].mxu0
    %v566 = vadd.f32 0.0, %v565
    %v567 = vpop.f32.mrb[0].mxu0
    %v568 = vpop.f32.mrb[0].mxu0
    %v569 = vadd.f32 0.0, %v568
    %v570 = vpop.f32.mrb[0].mxu0
    %571 = vdwg.mxu0
    %v572 = vadd.f32 %v91, %v446
    %v573 = vadd.f32 %v92, %v449
    %v574 = vadd.f32 %v93, %v454
    %v575 = vadd.f32 %v94, %v457
    %v576 = vadd.f32 %v95, %v462
    %v577 = vadd.f32 %v96, %v465
    %v578 = vadd.f32 %v97, %v470
    %v579 = vadd.f32 %v98, %v473
    %v580 = vadd.f32 %v99, %v478
    %v581 = vadd.f32 %v100, %v481
    %v582 = vadd.f32 %v101, %v486
    %v583 = vadd.f32 %v102, %v489
    %v584 = vadd.f32 %v103, %v494
    %v585 = vadd.f32 %v104, %v497
    %v586 = vadd.f32 %v105, %v502
    %v587 = vadd.f32 %v106, %v505
    %v588 = vadd.f32 %v107, %v510
    %v589 = vadd.f32 %v108, %v513
    %v590 = vadd.f32 %v109, %v518
    %v591 = vadd.f32 %v110, %v521
    %v592 = vadd.f32 %v111, %v526
    %v593 = vadd.f32 %v112, %v529
    %v594 = vadd.f32 %v113, %v534
    %v595 = vadd.f32 %v114, %v537
    %v596 = vadd.f32 %v115, %v542
    %v597 = vadd.f32 %v116, %v545
    %v598 = vadd.f32 %v117, %v550
    %v599 = vadd.f32 %v118, %v553
    %v600 = vadd.f32 %v119, %v558
    %v601 = vadd.f32 %v120, %v561
    %v602 = vadd.f32 %v121, %v566
    %v603 = vadd.f32 %v122, %v569
    %604 = vst [vmem:[#allocation2] sm:$0xff] %v572
    %605 = vst [vmem:[#allocation2 + $0x8] sm:$0xff] %v573
    %606 = vst [vmem:[#allocation2 + $0x10] sm:$0xff] %v574
    %607 = vst [vmem:[#allocation2 + $0x18] sm:$0xff] %v575
    %608 = vst [vmem:[#allocation2 + $0x20] sm:$0xff] %v576
    %609 = vst [vmem:[#allocation2 + $0x28] sm:$0xff] %v577
    %610 = vst [vmem:[#allocation2 + $0x30] sm:$0xff] %v578
    %611 = vst [vmem:[#allocation2 + $0x38] sm:$0xff] %v579
    %612 = vst [vmem:[#allocation2 + $0x40] sm:$0xff] %v580
    %613 = vst [vmem:[#allocation2 + $0x48] sm:$0xff] %v581
    %614 = vst [vmem:[#allocation2 + $0x50] sm:$0xff] %v582
    %615 = vst [vmem:[#allocation2 + $0x58] sm:$0xff] %v583
    %616 = vst [vmem:[#allocation2 + $0x60] sm:$0xff] %v584
    %617 = vst [vmem:[#allocation2 + $0x68] sm:$0xff] %v585
    %618 = vst [vmem:[#allocation2 + $0x70] sm:$0xff] %v586
    %619 = vst [vmem:[#allocation2 + $0x78] sm:$0xff] %v587
    %620 = vst [vmem:[#allocation2 + $0x80] sm:$0xff] %v588
    %621 = vst [vmem:[#allocation2 + $0x88] sm:$0xff] %v589
    %622 = vst [vmem:[#allocation2 + $0x90] sm:$0xff] %v590
    %623 = vst [vmem:[#allocation2 + $0x98] sm:$0xff] %v591
    %624 = vst [vmem:[#allocation2 + $0xa0] sm:$0xff] %v592
    %625 = vst [vmem:[#allocation2 + $0xa8] sm:$0xff] %v593
    %626 = vst [vmem:[#allocation2 + $0xb0] sm:$0xff] %v594
    %627 = vst [vmem:[#allocation2 + $0xb8] sm:$0xff] %v595
    %628 = vst [vmem:[#allocation2 + $0xc0] sm:$0xff] %v596
    %629 = vst [vmem:[#allocation2 + $0xc8] sm:$0xff] %v597
    %630 = vst [vmem:[#allocation2 + $0xd0] sm:$0xff] %v598
    %631 = vst [vmem:[#allocation2 + $0xd8] sm:$0xff] %v599
    %632 = vst [vmem:[#allocation2 + $0xe0] sm:$0xff] %v600
    %633 = vst [vmem:[#allocation2 + $0xe8] sm:$0xff] %v601
    %634 = vst [vmem:[#allocation2 + $0xf0] sm:$0xff] %v602
    %635 = vst [vmem:[#allocation2 + $0xf8] sm:$0xff] %v603
    // Predicated region
    $region18: #{recsys_gnn_forward.5} parent=1 // pred_check
      %p636 = pneg %p18
    $region19: #{recsys_gnn_forward.5} parent=1 // pred_check_branch
      %638 = sbr.rel (%p636) target = $region21
    $region20: #{recsys_gnn_forward.5} parent=1 // pred_region
      %v639 = vld [vmem:[#allocation2] sm:$0xff]
      %v640 = vld [vmem:[#allocation2 + $0x8] sm:$0xff]
      %v641 = vld [vmem:[#allocation2 + $0x10] sm:$0xff]
      %v642 = vld [vmem:[#allocation2 + $0x18] sm:$0xff]
      %v643 = vld [vmem:[#allocation2 + $0x20] sm:$0xff]
      %v644 = vld [vmem:[#allocation2 + $0x28] sm:$0xff]
      %v645 = vld [vmem:[#allocation2 + $0x30] sm:$0xff]
      %v646 = vld [vmem:[#allocation2 + $0x38] sm:$0xff]
      %v647 = vld [vmem:[#allocation2 + $0x40] sm:$0xff]
      %v648 = vld [vmem:[#allocation2 + $0x48] sm:$0xff]
      %v649 = vld [vmem:[#allocation2 + $0x50] sm:$0xff]
      %v650 = vld [vmem:[#allocation2 + $0x58] sm:$0xff]
      %v651 = vld [vmem:[#allocation2 + $0x60] sm:$0xff]
      %v652 = vld [vmem:[#allocation2 + $0x68] sm:$0xff]
      %v653 = vld [vmem:[#allocation2 + $0x70] sm:$0xff]
      %v654 = vld [vmem:[#allocation2 + $0x78] sm:$0xff]
      %v655 = vld [vmem:[#allocation2 + $0x80] sm:$0xff]
      %v656 = vld [vmem:[#allocation2 + $0x88] sm:$0xff]
      %v657 = vld [vmem:[#allocation2 + $0x90] sm:$0xff]
      %v658 = vld [vmem:[#allocation2 + $0x98] sm:$0xff]
      %v659 = vld [vmem:[#allocation2 + $0xa0] sm:$0xff]
      %v660 = vld [vmem:[#allocation2 + $0xa8] sm:$0xff]
      %v661 = vld [vmem:[#allocation2 + $0xb0] sm:$0xff]
      %v662 = vld [vmem:[#allocation2 + $0xb8] sm:$0xff]
      %v663 = vld [vmem:[#allocation2 + $0xc0] sm:$0xff]
      %v664 = vld [vmem:[#allocation2 + $0xc8] sm:$0xff]
      %v665 = vld [vmem:[#allocation2 + $0xd0] sm:$0xff]
      %v666 = vld [vmem:[#allocation2 + $0xd8] sm:$0xff]
      %v667 = vld [vmem:[#allocation2 + $0xe0] sm:$0xff]
      %v668 = vld [vmem:[#allocation2 + $0xe8] sm:$0xff]
      %v669 = vld [vmem:[#allocation2 + $0xf0] sm:$0xff]
      %v670 = vld [vmem:[#allocation2 + $0xf8] sm:$0xff]
      %v671 = vpack.c.bf16 %v640, %v639
      %v672 = vpack.c.bf16 %v642, %v641
      %v673 = vpack.c.bf16 %v644, %v643
      %v674 = vpack.c.bf16 %v646, %v645
      %v675 = vpack.c.bf16 %v648, %v647
      %v676 = vpack.c.bf16 %v650, %v649
      %v677 = vpack.c.bf16 %v652, %v651
      %v678 = vpack.c.bf16 %v654, %v653
      %v679 = vpack.c.bf16 %v656, %v655
      %v680 = vpack.c.bf16 %v658, %v657
      %v681 = vpack.c.bf16 %v660, %v659
      %v682 = vpack.c.bf16 %v662, %v661
      %v683 = vpack.c.bf16 %v664, %v663
      %v684 = vpack.c.bf16 %v666, %v665
      %v685 = vpack.c.bf16 %v668, %v667
      %v686 = vpack.c.bf16 %v670, %v669
      %v703 = vunpack.c.l.b16 %v671
      %v704 = vunpack.c.h.b16 %v671
      %v705 = vunpack.c.l.b16 %v672
      %v706 = vunpack.c.h.b16 %v672
      %v707 = vunpack.c.l.b16 %v673
      %v708 = vunpack.c.h.b16 %v673
      %v709 = vunpack.c.l.b16 %v674
      %v710 = vunpack.c.h.b16 %v674
      %v711 = vunpack.c.l.b16 %v675
      %v712 = vunpack.c.h.b16 %v675
      %v713 = vunpack.c.l.b16 %v676
      %v714 = vunpack.c.h.b16 %v676
      %v715 = vunpack.c.l.b16 %v677
      %v716 = vunpack.c.h.b16 %v677
      %v717 = vunpack.c.l.b16 %v678
      %v718 = vunpack.c.h.b16 %v678
      %v719 = vunpack.c.l.b16 %v679
      %v720 = vunpack.c.h.b16 %v679
      %v721 = vunpack.c.l.b16 %v680
      %v722 = vunpack.c.h.b16 %v680
      %v723 = vunpack.c.l.b16 %v681
      %v724 = vunpack.c.h.b16 %v681
      %v725 = vunpack.c.l.b16 %v682
      %v726 = vunpack.c.h.b16 %v682
      %v727 = vunpack.c.l.b16 %v683
      %v728 = vunpack.c.h.b16 %v683
      %v729 = vunpack.c.l.b16 %v684
      %v730 = vunpack.c.h.b16 %v684
      %v731 = vunpack.c.l.b16 %v685
      %v732 = vunpack.c.h.b16 %v685
      %v733 = vunpack.c.l.b16 %v686
      %v734 = vunpack.c.h.b16 %v686
      %v735 = vpack.c.b16 %v703, %v703
      %v736 = vpack.c.b16 %v704, %v704
      %v737 = vpack.c.b16 %v705, %v705
      %v738 = vpack.c.b16 %v706, %v706
      %v739 = vpack.c.b16 %v707, %v707
      %v740 = vpack.c.b16 %v708, %v708
      %v741 = vpack.c.b16 %v709, %v709
      %v742 = vpack.c.b16 %v710, %v710
      %v743 = vpack.c.b16 %v711, %v711
      %v744 = vpack.c.b16 %v712, %v712
      %v745 = vpack.c.b16 %v713, %v713
      %v746 = vpack.c.b16 %v714, %v714
      %v747 = vpack.c.b16 %v715, %v715
      %v748 = vpack.c.b16 %v716, %v716
      %v749 = vpack.c.b16 %v717, %v717
      %v750 = vpack.c.b16 %v718, %v718
      %v751 = vpack.c.b16 %v719, %v719
      %v752 = vpack.c.b16 %v720, %v720
      %v753 = vpack.c.b16 %v721, %v721
      %v754 = vpack.c.b16 %v722, %v722
      %v755 = vpack.c.b16 %v723, %v723
      %v756 = vpack.c.b16 %v724, %v724
      %v757 = vpack.c.b16 %v725, %v725
      %v758 = vpack.c.b16 %v726, %v726
      %v759 = vpack.c.b16 %v727, %v727
      %v760 = vpack.c.b16 %v728, %v728
      %v761 = vpack.c.b16 %v729, %v729
      %v762 = vpack.c.b16 %v730, %v730
      %v763 = vpack.c.b16 %v731, %v731
      %v764 = vpack.c.b16 %v732, %v732
      %v765 = vpack.c.b16 %v733, %v733
      %v766 = vpack.c.b16 %v734, %v734
      %799 = vst [vmem:[#allocation3] sm:$0xf] %v735
      %800 = vst [vmem:[#allocation3 + $0x4] sm:$0xf] %v736
      %801 = vst [vmem:[#allocation3 + $0x8] sm:$0xf] %v737
      %802 = vst [vmem:[#allocation3 + $0xc] sm:$0xf] %v738
      %803 = vst [vmem:[#allocation3 + $0x10] sm:$0xf] %v739
      %804 = vst [vmem:[#allocation3 + $0x14] sm:$0xf] %v740
      %805 = vst [vmem:[#allocation3 + $0x18] sm:$0xf] %v741
      %806 = vst [vmem:[#allocation3 + $0x1c] sm:$0xf] %v742
      %807 = vst [vmem:[#allocation3 + $0x20] sm:$0xf] %v743
      %808 = vst [vmem:[#allocation3 + $0x24] sm:$0xf] %v744
      %809 = vst [vmem:[#allocation3 + $0x28] sm:$0xf] %v745
      %810 = vst [vmem:[#allocation3 + $0x2c] sm:$0xf] %v746
      %811 = vst [vmem:[#allocation3 + $0x30] sm:$0xf] %v747
      %812 = vst [vmem:[#allocation3 + $0x34] sm:$0xf] %v748
      %813 = vst [vmem:[#allocation3 + $0x38] sm:$0xf] %v749
      %814 = vst [vmem:[#allocation3 + $0x3c] sm:$0xf] %v750
      %815 = vst [vmem:[#allocation3 + $0x40] sm:$0xf] %v751
      %816 = vst [vmem:[#allocation3 + $0x44] sm:$0xf] %v752
      %817 = vst [vmem:[#allocation3 + $0x48] sm:$0xf] %v753
      %818 = vst [vmem:[#allocation3 + $0x4c] sm:$0xf] %v754
      %819 = vst [vmem:[#allocation3 + $0x50] sm:$0xf] %v755
      %820 = vst [vmem:[#allocation3 + $0x54] sm:$0xf] %v756
      %821 = vst [vmem:[#allocation3 + $0x58] sm:$0xf] %v757
      %822 = vst [vmem:[#allocation3 + $0x5c] sm:$0xf] %v758
      %823 = vst [vmem:[#allocation3 + $0x60] sm:$0xf] %v759
      %824 = vst [vmem:[#allocation3 + $0x64] sm:$0xf] %v760
      %825 = vst [vmem:[#allocation3 + $0x68] sm:$0xf] %v761
      %826 = vst [vmem:[#allocation3 + $0x6c] sm:$0xf] %v762
      %827 = vst [vmem:[#allocation3 + $0x70] sm:$0xf] %v763
      %828 = vst [vmem:[#allocation3 + $0x74] sm:$0xf] %v764
      %829 = vst [vmem:[#allocation3 + $0x78] sm:$0xf] %v765
      %830 = vst [vmem:[#allocation3 + $0x7c] sm:$0xf] %v766
      %v831 = vld [vmem:[%s2] sm:$0xff]
      %v832 = vld [vmem:[%s2 + $0x8] sm:$0xff]
      %v833 = vld [vmem:[%s2 + $0x10] sm:$0xff]
      %v834 = vld [vmem:[%s2 + $0x18] sm:$0xff]
      %v835 = vld [vmem:[%s2 + $0x20] sm:$0xff]
      %v836 = vld [vmem:[%s2 + $0x28] sm:$0xff]
      %v837 = vld [vmem:[%s2 + $0x30] sm:$0xff]
      %v838 = vld [vmem:[%s2 + $0x38] sm:$0xff]
      %v839 = vld [vmem:[%s2 + $0x40] sm:$0xff]
      %v840 = vld [vmem:[%s2 + $0x48] sm:$0xff]
      %v841 = vld [vmem:[%s2 + $0x50] sm:$0xff]
      %v842 = vld [vmem:[%s2 + $0x58] sm:$0xff]
      %v843 = vld [vmem:[%s2 + $0x60] sm:$0xff]
      %v844 = vld [vmem:[%s2 + $0x68] sm:$0xff]
      %v845 = vld [vmem:[%s2 + $0x70] sm:$0xff]
      %v846 = vld [vmem:[%s2 + $0x78] sm:$0xff]
      %v847 = vld [vmem:[%s2 + $0x80] sm:$0xff]
      %v848 = vld [vmem:[%s2 + $0x88] sm:$0xff]
      %v849 = vld [vmem:[%s2 + $0x90] sm:$0xff]
      %v850 = vld [vmem:[%s2 + $0x98] sm:$0xff]
      %v851 = vld [vmem:[%s2 + $0xa0] sm:$0xff]
      %v852 = vld [vmem:[%s2 + $0xa8] sm:$0xff]
      %v853 = vld [vmem:[%s2 + $0xb0] sm:$0xff]
      %v854 = vld [vmem:[%s2 + $0xb8] sm:$0xff]
      %v855 = vld [vmem:[%s2 + $0xc0] sm:$0xff]
      %v856 = vld [vmem:[%s2 + $0xc8] sm:$0xff]
      %v857 = vld [vmem:[%s2 + $0xd0] sm:$0xff]
      %v858 = vld [vmem:[%s2 + $0xd8] sm:$0xff]
      %v859 = vld [vmem:[%s2 + $0xe0] sm:$0xff]
      %v860 = vld [vmem:[%s2 + $0xe8] sm:$0xff]
      %v861 = vld [vmem:[%s2 + $0xf0] sm:$0xff]
      %v862 = vld [vmem:[%s2 + $0xf8] sm:$0xff]
      %v863 = vld [vmem:[#allocation2] sm:$0xff]
      %v864 = vld [vmem:[#allocation2 + $0x8] sm:$0xff]
      %v865 = vld [vmem:[#allocation2 + $0x10] sm:$0xff]
      %v866 = vld [vmem:[#allocation2 + $0x18] sm:$0xff]
      %v867 = vld [vmem:[#allocation2 + $0x20] sm:$0xff]
      %v868 = vld [vmem:[#allocation2 + $0x28] sm:$0xff]
      %v869 = vld [vmem:[#allocation2 + $0x30] sm:$0xff]
      %v870 = vld [vmem:[#allocation2 + $0x38] sm:$0xff]
      %v871 = vld [vmem:[#allocation2 + $0x40] sm:$0xff]
      %v872 = vld [vmem:[#allocation2 + $0x48] sm:$0xff]
      %v873 = vld [vmem:[#allocation2 + $0x50] sm:$0xff]
      %v874 = vld [vmem:[#allocation2 + $0x58] sm:$0xff]
      %v875 = vld [vmem:[#allocation2 + $0x60] sm:$0xff]
      %v876 = vld [vmem:[#allocation2 + $0x68] sm:$0xff]
      %v877 = vld [vmem:[#allocation2 + $0x70] sm:$0xff]
      %v878 = vld [vmem:[#allocation2 + $0x78] sm:$0xff]
      %v879 = vld [vmem:[#allocation2 + $0x80] sm:$0xff]
      %v880 = vld [vmem:[#allocation2 + $0x88] sm:$0xff]
      %v881 = vld [vmem:[#allocation2 + $0x90] sm:$0xff]
      %v882 = vld [vmem:[#allocation2 + $0x98] sm:$0xff]
      %v883 = vld [vmem:[#allocation2 + $0xa0] sm:$0xff]
      %v884 = vld [vmem:[#allocation2 + $0xa8] sm:$0xff]
      %v885 = vld [vmem:[#allocation2 + $0xb0] sm:$0xff]
      %v886 = vld [vmem:[#allocation2 + $0xb8] sm:$0xff]
      %v887 = vld [vmem:[#allocation2 + $0xc0] sm:$0xff]
      %v888 = vld [vmem:[#allocation2 + $0xc8] sm:$0xff]
      %v889 = vld [vmem:[#allocation2 + $0xd0] sm:$0xff]
      %v890 = vld [vmem:[#allocation2 + $0xd8] sm:$0xff]
      %v891 = vld [vmem:[#allocation2 + $0xe0] sm:$0xff]
      %v892 = vld [vmem:[#allocation2 + $0xe8] sm:$0xff]
      %v893 = vld [vmem:[#allocation2 + $0xf0] sm:$0xff]
      %v894 = vld [vmem:[#allocation2 + $0xf8] sm:$0xff]
      %v895 = vadd.f32 %v831, %v863
      %v896 = vadd.f32 %v832, %v864
      %v897 = vadd.f32 %v833, %v865
      %v898 = vadd.f32 %v834, %v866
      %v899 = vadd.f32 %v835, %v867
      %v900 = vadd.f32 %v836, %v868
      %v901 = vadd.f32 %v837, %v869
      %v902 = vadd.f32 %v838, %v870
      %v903 = vadd.f32 %v839, %v871
      %v904 = vadd.f32 %v840, %v872
      %v905 = vadd.f32 %v841, %v873
      %v906 = vadd.f32 %v842, %v874
      %v907 = vadd.f32 %v843, %v875
      %v908 = vadd.f32 %v844, %v876
      %v909 = vadd.f32 %v845, %v877
      %v910 = vadd.f32 %v846, %v878
      %v911 = vadd.f32 %v847, %v879
      %v912 = vadd.f32 %v848, %v880
      %v913 = vadd.f32 %v849, %v881
      %v914 = vadd.f32 %v850, %v882
      %v915 = vadd.f32 %v851, %v883
      %v916 = vadd.f32 %v852, %v884
      %v917 = vadd.f32 %v853, %v885
      %v918 = vadd.f32 %v854, %v886
      %v919 = vadd.f32 %v855, %v887
      %v920 = vadd.f32 %v856, %v888
      %v921 = vadd.f32 %v857, %v889
      %v922 = vadd.f32 %v858, %v890
      %v923 = vadd.f32 %v859, %v891
      %v924 = vadd.f32 %v860, %v892
      %v925 = vadd.f32 %v861, %v893
      %v926 = vadd.f32 %v862, %v894
      %927 = vst [vmem:[%s4] sm:$0xff] %v895
      %928 = vst [vmem:[%s4 + $0x8] sm:$0xff] %v896
      %929 = vst [vmem:[%s4 + $0x10] sm:$0xff] %v897
      %930 = vst [vmem:[%s4 + $0x18] sm:$0xff] %v898
      %931 = vst [vmem:[%s4 + $0x20] sm:$0xff] %v899
      %932 = vst [vmem:[%s4 + $0x28] sm:$0xff] %v900
      %933 = vst [vmem:[%s4 + $0x30] sm:$0xff] %v901
      %934 = vst [vmem:[%s4 + $0x38] sm:$0xff] %v902
      %935 = vst [vmem:[%s4 + $0x40] sm:$0xff] %v903
      %936 = vst [vmem:[%s4 + $0x48] sm:$0xff] %v904
      %937 = vst [vmem:[%s4 + $0x50] sm:$0xff] %v905
      %938 = vst [vmem:[%s4 + $0x58] sm:$0xff] %v906
      %939 = vst [vmem:[%s4 + $0x60] sm:$0xff] %v907
      %940 = vst [vmem:[%s4 + $0x68] sm:$0xff] %v908
      %941 = vst [vmem:[%s4 + $0x70] sm:$0xff] %v909
      %942 = vst [vmem:[%s4 + $0x78] sm:$0xff] %v910
      %943 = vst [vmem:[%s4 + $0x80] sm:$0xff] %v911
      %944 = vst [vmem:[%s4 + $0x88] sm:$0xff] %v912
      %945 = vst [vmem:[%s4 + $0x90] sm:$0xff] %v913
      %946 = vst [vmem:[%s4 + $0x98] sm:$0xff] %v914
      %947 = vst [vmem:[%s4 + $0xa0] sm:$0xff] %v915
      %948 = vst [vmem:[%s4 + $0xa8] sm:$0xff] %v916
      %949 = vst [vmem:[%s4 + $0xb0] sm:$0xff] %v917
      %950 = vst [vmem:[%s4 + $0xb8] sm:$0xff] %v918
      %951 = vst [vmem:[%s4 + $0xc0] sm:$0xff] %v919
      %952 = vst [vmem:[%s4 + $0xc8] sm:$0xff] %v920
      %953 = vst [vmem:[%s4 + $0xd0] sm:$0xff] %v921
      %954 = vst [vmem:[%s4 + $0xd8] sm:$0xff] %v922
      %955 = vst [vmem:[%s4 + $0xe0] sm:$0xff] %v923
      %956 = vst [vmem:[%s4 + $0xe8] sm:$0xff] %v924
      %957 = vst [vmem:[%s4 + $0xf0] sm:$0xff] %v925
      %958 = vst [vmem:[%s4 + $0xf8] sm:$0xff] %v926
    $region21: #{recsys_gnn_forward.5} parent=1 // pred_fallthru
      _
    // Predicated region
    $region22: #{recsys_gnn_forward.5} parent=1 // pred_check
      _
    $region23: #{recsys_gnn_forward.5} parent=1 // pred_check_branch
      %960 = sbr.rel (0) target = $region25
    $region24: #{recsys_gnn_forward.5} parent=1 // pred_region
      %s962 = ssub.s32 2048, 2048
      %963 = vsyncadd [#allocation4], %s962
      %s964 = sshll.u32 [#allocation3], 4
      %s965 = int_to_ptr.vmem [resolvable:$true] %s964
      %970 = dma.vmem_to_hbm [thread:$0]  %s965, 2048, %s3, [#allocation4], 64, 64, 4
    $region25: #{recsys_gnn_forward.5} parent=1 // pred_fallthru
      _
    // Predicated region
    $region26: #{recsys_gnn_forward.5} parent=1 // pred_check
      _
    $region27: #{recsys_gnn_forward.5} parent=1 // pred_check_branch
      %972 = sbr.rel (0) target = $region29
    $region28: #{recsys_gnn_forward.5} parent=1 // pred_region
      _
    $region29: #{recsys_gnn_forward.5} parent=1 // pred_fallthru
      _
    // Predicated region
    $region30: #{recsys_gnn_forward.5} parent=1 // pred_check
      _
    $region31: #{recsys_gnn_forward.5} parent=1 // pred_check_branch
      %974 = sbr.rel (0) target = $region33
    $region32: #{recsys_gnn_forward.5} parent=1 // pred_region
      %975 = dma.done [#allocation4], 2048
    $region33: #{recsys_gnn_forward.5} parent=1 // pred_fallthru
      _
    // Predicated region
    $region34: #{recsys_gnn_forward.5} parent=1 // pred_check
      _
    $region35: #{recsys_gnn_forward.5} parent=1 // pred_check_branch
      %977 = sbr.rel (0) target = $region37
    $region36: #{recsys_gnn_forward.5} parent=1 // pred_region
      _
    $region37: #{recsys_gnn_forward.5} parent=1 // pred_fallthru
      _
    %978 = vsyncpa [#allocation4], 1

</llo_original>
